<compile_context>
chip_gen: v7x
topology: tpu7x:2x2x1
jax: 0.10.0
libtpu: 0.0.40
codegen_flags: <defaults>
</compile_context>

<pallas_src>
import functools

import jax
import jax.numpy as jnp
from jax.experimental import pallas as pl
from jax.experimental.pallas import tpu as pltpu


def _round_up(x, m):
    return (x + m - 1) // m * m


def _conv3x3_s2_kernel(rp_ref, w_ref, b_ref, o_ref):
    # rp_ref: (TH, 3, 2, Wop+1, Cin)  tap-row activations for TH output rows
    # w_ref:  (9, Cin, Coutp)         conv weight, tap-major (t = ky*3 + kx)
    # b_ref:  (1, Coutp)              bias (f32)
    # o_ref:  (TH*Wop, Coutp)         output rows (flattened (row, ox))
    th = rp_ref.shape[0]
    wop = rp_ref.shape[3] - 1
    cin = rp_ref.shape[4]
    coutp = w_ref.shape[2]

    acc = jnp.zeros((th * wop, coutp), jnp.float32)
    # 9-tap accumulation on the MXU; unrolled at trace time.
    for ky in range(3):
        for kx in range(3):
            # tap (ky, kx) reads padded-input pixel (2*oy + ky, 2*ox + kx):
            #   phase px = kx % 2, column offset j0 = kx // 2 within that phase.
            j0 = kx // 2
            a = rp_ref[:, ky, kx % 2, j0:j0 + wop, :]          # (TH, Wop, Cin)
            a2 = a.reshape(th * wop, cin)                      # tile-aligned collapse
            acc = acc + jnp.dot(a2, w_ref[ky * 3 + kx],
                                preferred_element_type=jnp.float32)

    o_ref[...] = (acc + b_ref[...]).astype(o_ref.dtype)


def downsample_pallas(x_nchw, weight, bias, *, compute_dtype=None,
                      target_rows=512, vmem_budget_bytes=20 * 1024 * 1024):
    """3x3 stride-2 pad-1 conv (PyTorch Conv2d semantics).

    x_nchw: (N, Cin, H, W); weight: (Cout, Cin, 3, 3); bias: (Cout,)
    returns (N, Cout, Ho, Wo).
    """
    N, Cin, H, W = x_nchw.shape
    Cout = weight.shape[0]
    Ho = (H + 2 - 3) // 2 + 1
    Wo = (W + 2 - 3) // 2 + 1

    out_dtype = x_nchw.dtype
    cdt = jnp.dtype(compute_dtype) if compute_dtype is not None else jnp.dtype(x_nchw.dtype)
    c_item = cdt.itemsize
    o_item = jnp.dtype(out_dtype).itemsize

    # Sublane count for the compute dtype (8 for f32, 16 for bf16): Wop multiple of it
    # keeps the in-kernel reshape a pure metadata change (no relayout).
    sublane = 8 * max(1, 4 // c_item)
    Wop = _round_up(Wo, sublane)
    Coutp = _round_up(Cout, 128)          # lane-dense, unmasked stores / full MXU N-dim

    # ---- layout glue (XLA): NCHW -> NHWC, pad, build tap-row tensor (~1.5x input) ----
    x = jnp.transpose(x_nchw, (0, 2, 3, 1)).astype(cdt)
    Hp = 2 * Ho + 1
    Wp = 2 * Wop + 2
    x_pad = jnp.pad(x, ((0, 0), (1, Hp - H - 1), (1, Wp - W - 1), (0, 0)))

    rows = []
    for ky in range(3):
        phases = []
        for px in range(2):
            # (N, Ho, Wop+1, Cin): padded-input rows 2*oy+ky, columns 2*jx+px
            phases.append(x_pad[:, ky:ky + 2 * Ho - 1:2, px:px + 2 * Wop + 1:2, :])
        rows.append(jnp.stack(phases, axis=2))          # (N, Ho, 2, Wop+1, Cin)
    rp = jnp.stack(rows, axis=2)                         # (N, Ho, 3, 2, Wop+1, Cin)

    R = N * Ho
    rp = rp.reshape(R, 3, 2, Wop + 1, Cin)

    # ---- tile size: ~target_rows matmul rows, >=2 grid steps when possible, VMEM-budgeted ----
    TH = max(1, min(target_rows // Wop, -(-R // 2)))

    def step_bytes(th):
        # conservative (f32-tiled) estimate of per-step VMEM, incl. double buffers + weight
        cin_l = _round_up(Cin, 128)
        wrow_s = _round_up(Wop + 1, 8)
        in_b = th * 3 * 2 * wrow_s * cin_l * c_item
        out_b = th * Wop * Coutp * o_item
        acc_b = th * Wop * Coutp * 4
        w_b = 9 * _round_up(Cin, 8) * Coutp * c_item
        return 2 * (in_b + out_b) + acc_b + w_b

    while TH > 1 and step_bytes(TH) > vmem_budget_bytes:
        TH = max(1, TH // 2)

    R_pad = _round_up(R, TH)
    if R_pad != R:
        rp = jnp.pad(rp, ((0, R_pad - R), (0, 0), (0, 0), (0, 0), (0, 0)))

    # weight (Cout, Cin, 3, 3) -> (ky, kx, ci, co) -> (9, Cin, Coutp); bias stays f32
    w2 = jnp.transpose(weight, (2, 3, 1, 0)).reshape(9, Cin, Cout).astype(cdt)
    w2 = jnp.pad(w2, ((0, 0), (0, 0), (0, Coutp - Cout)))
    b2 = jnp.pad(bias.astype(jnp.float32), (0, Coutp - Cout)).reshape(1, Coutp)

    TM = TH * Wop
    grid = (R_pad // TH,)

    flops = 2 * N * Ho * Wo * 9 * Cin * Cout
    bytes_accessed = (rp.size * rp.dtype.itemsize + w2.size * w2.dtype.itemsize
                      + b2.size * 4 + R_pad * Wop * Coutp * o_item)

    out = pl.pallas_call(
        _conv3x3_s2_kernel,
        out_shape=jax.ShapeDtypeStruct((R_pad * Wop, Coutp), out_dtype),
        grid_spec=pltpu.PrefetchScalarGridSpec(
            num_scalar_prefetch=0,
            grid=grid,
            in_specs=[
                pl.BlockSpec((TH, 3, 2, Wop + 1, Cin), lambda m: (m, 0, 0, 0, 0)),
                pl.BlockSpec((9, Cin, Coutp), lambda m: (0, 0, 0)),
                pl.BlockSpec((1, Coutp), lambda m: (0, 0)),
            ],
            out_specs=pl.BlockSpec((TM, Coutp), lambda m: (m, 0)),
        ),
        compiler_params=pltpu.CompilerParams(
            dimension_semantics=("parallel",),
            vmem_limit_bytes=32 * 1024 * 1024,
        ),
        cost_estimate=pl.CostEstimate(
            flops=flops, transcendentals=0, bytes_accessed=bytes_accessed),
    )(rp, w2, b2)

    out = out.reshape(R_pad, Wop, Coutp)[:R, :Wo, :Cout]
    out = out.reshape(N, Ho, Wo, Cout)
    return jnp.transpose(out, (0, 3, 1, 2)).astype(out_dtype)


def _reference_conv(x_nchw, weight, bias):
    out = jax.lax.conv_general_dilated(
        x_nchw, weight,
        window_strides=(2, 2),
        padding=((1, 1), (1, 1)),
        dimension_numbers=("NCHW", "OIHW", "NCHW"),
    )
    return out + bias.reshape(1, -1, 1, 1)


if __name__ == "__main__":
    key = jax.random.PRNGKey(0)
    k_x, k_w, k_b = jax.random.split(key, 3)

    N, dim_in, dim_out, H, W = 2, 4, 8, 16, 16

    x = jax.random.normal(k_x, (N, dim_in, H, W), dtype=jnp.float32)
    weight = jax.random.normal(k_w, (dim_out, dim_in, 3, 3), dtype=jnp.float32) * 0.1
    bias = jax.random.normal(k_b, (dim_out,), dtype=jnp.float32) * 0.1

    fn = jax.jit(functools.partial(downsample_pallas))
    y = jax.block_until_ready(fn(x, weight, bias))

    y_ref = jax.block_until_ready(_reference_conv(x, weight, bias))
    assert y.shape == (N, dim_out, H // 2, W // 2), y.shape
    assert jnp.allclose(y, y_ref, atol=1e-5, rtol=1e-5), "mismatch vs reference conv"

    print("KERNEL_OK")
</pallas_src>

<mosaic_0001>
module attributes {stable_mosaic.version = 11 : i64} {
  func.func @_conv3x3_s2_kernel(%arg0: i32, %arg1: memref<8x3x2x9x4xf32, #tpu.memory_space<vmem>>, %arg2: memref<9x4x128xf32, #tpu.memory_space<vmem>>, %arg3: memref<1x128xf32, #tpu.memory_space<vmem>>, %arg4: memref<64x128xf32, #tpu.memory_space<vmem>>) attributes {dimension_semantics = [#tpu.dimension_semantics<parallel>], iteration_bounds = array<i64: 2>, scalar_prefetch = 0 : i64, scratch_operands = 0 : i64, tpu.core_type = #tpu.core_type<tc>, window_params = [{transform_indices = @transform_0, window_bounds = array<i64: 8, 3, 2, 9, 4>}, {pipeline_mode = #tpu.pipeline_mode<synchronous>, transform_indices = @transform_1, window_bounds = array<i64: 9, 4, 128>}, {pipeline_mode = #tpu.pipeline_mode<synchronous>, transform_indices = @transform_2, window_bounds = array<i64: 1, 128>}, {transform_indices = @transform_3, window_bounds = array<i64: 64, 128>}]} {
    %cst = arith.constant 0.000000e+00 : f32
    %0 = vector.broadcast %cst : f32 to vector<64x128xf32>
    %c0 = arith.constant 0 : index
    %c0_0 = arith.constant 0 : index
    %c0_1 = arith.constant 0 : index
    %c0_2 = arith.constant 0 : index
    %c0_3 = arith.constant 0 : index
    %1 = vector.load %arg1[%c0, %c0_0, %c0_1, %c0_2, %c0_3] : memref<8x3x2x9x4xf32, #tpu.memory_space<vmem>>, vector<8x1x1x8x4xf32>
    %2 = vector.shape_cast %1 : vector<8x1x1x8x4xf32> to vector<8x8x4xf32>
    %3 = vector.shape_cast %2 : vector<8x8x4xf32> to vector<64x4xf32>
    %c0_4 = arith.constant 0 : index
    %c0_5 = arith.constant 0 : index
    %c0_6 = arith.constant 0 : index
    %4 = vector.load %arg2[%c0_4, %c0_5, %c0_6] : memref<9x4x128xf32, #tpu.memory_space<vmem>>, vector<1x4x128xf32>
    %5 = vector.shape_cast %4 : vector<1x4x128xf32> to vector<4x128xf32>
    %cst_7 = arith.constant dense<0.000000e+00> : vector<64x128xf32>
    %6 = tpu.matmul %3, %5, %cst_7 {dimension_numbers = #tpu.dot_dimension_numbers<[1], [0], [0], [1], [0, 0, 1, 1], [], []>} : vector<64x4xf32>, vector<4x128xf32>, vector<64x128xf32> -> vector<64x128xf32>
    %7 = arith.addf %0, %6 : vector<64x128xf32>
    %c0_8 = arith.constant 0 : index
    %c0_9 = arith.constant 0 : index
    %c1 = arith.constant 1 : index
    %c0_10 = arith.constant 0 : index
    %c0_11 = arith.constant 0 : index
    %8 = vector.load %arg1[%c0_8, %c0_9, %c1, %c0_10, %c0_11] : memref<8x3x2x9x4xf32, #tpu.memory_space<vmem>>, vector<8x1x1x8x4xf32>
    %9 = vector.shape_cast %8 : vector<8x1x1x8x4xf32> to vector<8x8x4xf32>
    %10 = vector.shape_cast %9 : vector<8x8x4xf32> to vector<64x4xf32>
    %c1_12 = arith.constant 1 : index
    %c0_13 = arith.constant 0 : index
    %c0_14 = arith.constant 0 : index
    %11 = vector.load %arg2[%c1_12, %c0_13, %c0_14] : memref<9x4x128xf32, #tpu.memory_space<vmem>>, vector<1x4x128xf32>
    %12 = vector.shape_cast %11 : vector<1x4x128xf32> to vector<4x128xf32>
    %cst_15 = arith.constant dense<0.000000e+00> : vector<64x128xf32>
    %13 = tpu.matmul %10, %12, %cst_15 {dimension_numbers = #tpu.dot_dimension_numbers<[1], [0], [0], [1], [0, 0, 1, 1], [], []>} : vector<64x4xf32>, vector<4x128xf32>, vector<64x128xf32> -> vector<64x128xf32>
    %14 = arith.addf %7, %13 : vector<64x128xf32>
    %c0_16 = arith.constant 0 : index
    %c0_17 = arith.constant 0 : index
    %c0_18 = arith.constant 0 : index
    %c1_19 = arith.constant 1 : index
    %c0_20 = arith.constant 0 : index
    %15 = vector.load %arg1[%c0_16, %c0_17, %c0_18, %c1_19, %c0_20] : memref<8x3x2x9x4xf32, #tpu.memory_space<vmem>>, vector<8x1x1x8x4xf32>
    %16 = vector.shape_cast %15 : vector<8x1x1x8x4xf32> to vector<8x8x4xf32>
    %17 = vector.shape_cast %16 : vector<8x8x4xf32> to vector<64x4xf32>
    %c2 = arith.constant 2 : index
    %c0_21 = arith.constant 0 : index
    %c0_22 = arith.constant 0 : index
    %18 = vector.load %arg2[%c2, %c0_21, %c0_22] : memref<9x4x128xf32, #tpu.memory_space<vmem>>, vector<1x4x128xf32>
    %19 = vector.shape_cast %18 : vector<1x4x128xf32> to vector<4x128xf32>
    %cst_23 = arith.constant dense<0.000000e+00> : vector<64x128xf32>
    %20 = tpu.matmul %17, %19, %cst_23 {dimension_numbers = #tpu.dot_dimension_numbers<[1], [0], [0], [1], [0, 0, 1, 1], [], []>} : vector<64x4xf32>, vector<4x128xf32>, vector<64x128xf32> -> vector<64x128xf32>
    %21 = arith.addf %14, %20 : vector<64x128xf32>
    %c0_24 = arith.constant 0 : index
    %c1_25 = arith.constant 1 : index
    %c0_26 = arith.constant 0 : index
    %c0_27 = arith.constant 0 : index
    %c0_28 = arith.constant 0 : index
    %22 = vector.load %arg1[%c0_24, %c1_25, %c0_26, %c0_27, %c0_28] : memref<8x3x2x9x4xf32, #tpu.memory_space<vmem>>, vector<8x1x1x8x4xf32>
    %23 = vector.shape_cast %22 : vector<8x1x1x8x4xf32> to vector<8x8x4xf32>
    %24 = vector.shape_cast %23 : vector<8x8x4xf32> to vector<64x4xf32>
    %c3 = arith.constant 3 : index
    %c0_29 = arith.constant 0 : index
    %c0_30 = arith.constant 0 : index
    %25 = vector.load %arg2[%c3, %c0_29, %c0_30] : memref<9x4x128xf32, #tpu.memory_space<vmem>>, vector<1x4x128xf32>
    %26 = vector.shape_cast %25 : vector<1x4x128xf32> to vector<4x128xf32>
    %cst_31 = arith.constant dense<0.000000e+00> : vector<64x128xf32>
    %27 = tpu.matmul %24, %26, %cst_31 {dimension_numbers = #tpu.dot_dimension_numbers<[1], [0], [0], [1], [0, 0, 1, 1], [], []>} : vector<64x4xf32>, vector<4x128xf32>, vector<64x128xf32> -> vector<64x128xf32>
    %28 = arith.addf %21, %27 : vector<64x128xf32>
    %c0_32 = arith.constant 0 : index
    %c1_33 = arith.constant 1 : index
    %c1_34 = arith.constant 1 : index
    %c0_35 = arith.constant 0 : index
    %c0_36 = arith.constant 0 : index
    %29 = vector.load %arg1[%c0_32, %c1_33, %c1_34, %c0_35, %c0_36] : memref<8x3x2x9x4xf32, #tpu.memory_space<vmem>>, vector<8x1x1x8x4xf32>
    %30 = vector.shape_cast %29 : vector<8x1x1x8x4xf32> to vector<8x8x4xf32>
    %31 = vector.shape_cast %30 : vector<8x8x4xf32> to vector<64x4xf32>
    %c4 = arith.constant 4 : index
    %c0_37 = arith.constant 0 : index
    %c0_38 = arith.constant 0 : index
    %32 = vector.load %arg2[%c4, %c0_37, %c0_38] : memref<9x4x128xf32, #tpu.memory_space<vmem>>, vector<1x4x128xf32>
    %33 = vector.shape_cast %32 : vector<1x4x128xf32> to vector<4x128xf32>
    %cst_39 = arith.constant dense<0.000000e+00> : vector<64x128xf32>
    %34 = tpu.matmul %31, %33, %cst_39 {dimension_numbers = #tpu.dot_dimension_numbers<[1], [0], [0], [1], [0, 0, 1, 1], [], []>} : vector<64x4xf32>, vector<4x128xf32>, vector<64x128xf32> -> vector<64x128xf32>
    %35 = arith.addf %28, %34 : vector<64x128xf32>
    %c0_40 = arith.constant 0 : index
    %c1_41 = arith.constant 1 : index
    %c0_42 = arith.constant 0 : index
    %c1_43 = arith.constant 1 : index
    %c0_44 = arith.constant 0 : index
    %36 = vector.load %arg1[%c0_40, %c1_41, %c0_42, %c1_43, %c0_44] : memref<8x3x2x9x4xf32, #tpu.memory_space<vmem>>, vector<8x1x1x8x4xf32>
    %37 = vector.shape_cast %36 : vector<8x1x1x8x4xf32> to vector<8x8x4xf32>
    %38 = vector.shape_cast %37 : vector<8x8x4xf32> to vector<64x4xf32>
    %c5 = arith.constant 5 : index
    %c0_45 = arith.constant 0 : index
    %c0_46 = arith.constant 0 : index
    %39 = vector.load %arg2[%c5, %c0_45, %c0_46] : memref<9x4x128xf32, #tpu.memory_space<vmem>>, vector<1x4x128xf32>
    %40 = vector.shape_cast %39 : vector<1x4x128xf32> to vector<4x128xf32>
    %cst_47 = arith.constant dense<0.000000e+00> : vector<64x128xf32>
    %41 = tpu.matmul %38, %40, %cst_47 {dimension_numbers = #tpu.dot_dimension_numbers<[1], [0], [0], [1], [0, 0, 1, 1], [], []>} : vector<64x4xf32>, vector<4x128xf32>, vector<64x128xf32> -> vector<64x128xf32>
    %42 = arith.addf %35, %41 : vector<64x128xf32>
    %c0_48 = arith.constant 0 : index
    %c2_49 = arith.constant 2 : index
    %c0_50 = arith.constant 0 : index
    %c0_51 = arith.constant 0 : index
    %c0_52 = arith.constant 0 : index
    %43 = vector.load %arg1[%c0_48, %c2_49, %c0_50, %c0_51, %c0_52] : memref<8x3x2x9x4xf32, #tpu.memory_space<vmem>>, vector<8x1x1x8x4xf32>
    %44 = vector.shape_cast %43 : vector<8x1x1x8x4xf32> to vector<8x8x4xf32>
    %45 = vector.shape_cast %44 : vector<8x8x4xf32> to vector<64x4xf32>
    %c6 = arith.constant 6 : index
    %c0_53 = arith.constant 0 : index
    %c0_54 = arith.constant 0 : index
    %46 = vector.load %arg2[%c6, %c0_53, %c0_54] : memref<9x4x128xf32, #tpu.memory_space<vmem>>, vector<1x4x128xf32>
    %47 = vector.shape_cast %46 : vector<1x4x128xf32> to vector<4x128xf32>
    %cst_55 = arith.constant dense<0.000000e+00> : vector<64x128xf32>
    %48 = tpu.matmul %45, %47, %cst_55 {dimension_numbers = #tpu.dot_dimension_numbers<[1], [0], [0], [1], [0, 0, 1, 1], [], []>} : vector<64x4xf32>, vector<4x128xf32>, vector<64x128xf32> -> vector<64x128xf32>
    %49 = arith.addf %42, %48 : vector<64x128xf32>
    %c0_56 = arith.constant 0 : index
    %c2_57 = arith.constant 2 : index
    %c1_58 = arith.constant 1 : index
    %c0_59 = arith.constant 0 : index
    %c0_60 = arith.constant 0 : index
    %50 = vector.load %arg1[%c0_56, %c2_57, %c1_58, %c0_59, %c0_60] : memref<8x3x2x9x4xf32, #tpu.memory_space<vmem>>, vector<8x1x1x8x4xf32>
    %51 = vector.shape_cast %50 : vector<8x1x1x8x4xf32> to vector<8x8x4xf32>
    %52 = vector.shape_cast %51 : vector<8x8x4xf32> to vector<64x4xf32>
    %c7 = arith.constant 7 : index
    %c0_61 = arith.constant 0 : index
    %c0_62 = arith.constant 0 : index
    %53 = vector.load %arg2[%c7, %c0_61, %c0_62] : memref<9x4x128xf32, #tpu.memory_space<vmem>>, vector<1x4x128xf32>
    %54 = vector.shape_cast %53 : vector<1x4x128xf32> to vector<4x128xf32>
    %cst_63 = arith.constant dense<0.000000e+00> : vector<64x128xf32>
    %55 = tpu.matmul %52, %54, %cst_63 {dimension_numbers = #tpu.dot_dimension_numbers<[1], [0], [0], [1], [0, 0, 1, 1], [], []>} : vector<64x4xf32>, vector<4x128xf32>, vector<64x128xf32> -> vector<64x128xf32>
    %56 = arith.addf %49, %55 : vector<64x128xf32>
    %c0_64 = arith.constant 0 : index
    %c2_65 = arith.constant 2 : index
    %c0_66 = arith.constant 0 : index
    %c1_67 = arith.constant 1 : index
    %c0_68 = arith.constant 0 : index
    %57 = vector.load %arg1[%c0_64, %c2_65, %c0_66, %c1_67, %c0_68] : memref<8x3x2x9x4xf32, #tpu.memory_space<vmem>>, vector<8x1x1x8x4xf32>
    %58 = vector.shape_cast %57 : vector<8x1x1x8x4xf32> to vector<8x8x4xf32>
    %59 = vector.shape_cast %58 : vector<8x8x4xf32> to vector<64x4xf32>
    %c8 = arith.constant 8 : index
    %c0_69 = arith.constant 0 : index
    %c0_70 = arith.constant 0 : index
    %60 = vector.load %arg2[%c8, %c0_69, %c0_70] : memref<9x4x128xf32, #tpu.memory_space<vmem>>, vector<1x4x128xf32>
    %61 = vector.shape_cast %60 : vector<1x4x128xf32> to vector<4x128xf32>
    %cst_71 = arith.constant dense<0.000000e+00> : vector<64x128xf32>
    %62 = tpu.matmul %59, %61, %cst_71 {dimension_numbers = #tpu.dot_dimension_numbers<[1], [0], [0], [1], [0, 0, 1, 1], [], []>} : vector<64x4xf32>, vector<4x128xf32>, vector<64x128xf32> -> vector<64x128xf32>
    %63 = arith.addf %56, %62 : vector<64x128xf32>
    %c0_72 = arith.constant 0 : index
    %c0_73 = arith.constant 0 : index
    %64 = vector.load %arg3[%c0_72, %c0_73] : memref<1x128xf32, #tpu.memory_space<vmem>>, vector<1x128xf32>
    %65 = vector.broadcast %64 : vector<1x128xf32> to vector<64x128xf32>
    %66 = arith.addf %63, %65 : vector<64x128xf32>
    %c0_74 = arith.constant 0 : index
    %c0_75 = arith.constant 0 : index
    %67 = vector.load %arg4[%c0_74, %c0_75] : memref<64x128xf32, #tpu.memory_space<vmem>>, vector<64x128xf32>
    tpu.vector_store %arg4[%c0_74, %c0_75], %66 {strides = array<i32>} : memref<64x128xf32, #tpu.memory_space<vmem>>, vector<64x128xf32>,
    return
  }
  func.func @transform_0(%arg0: i32) -> (i32, i32, i32, i32, i32) {
    %c0_i32 = arith.constant 0 : i32
    %c0_i32_0 = arith.constant 0 : i32
    %c0_i32_1 = arith.constant 0 : i32
    %c0_i32_2 = arith.constant 0 : i32
    %c0_i32_3 = arith.constant 0 : i32
    return %arg0, %c0_i32, %c0_i32_0, %c0_i32_1, %c0_i32_2 : i32, i32, i32, i32, i32
  }
  func.func @transform_1(%arg0: i32) -> (i32, i32, i32) {
    %c0_i32 = arith.constant 0 : i32
    %c0_i32_0 = arith.constant 0 : i32
    %c0_i32_1 = arith.constant 0 : i32
    %c0_i32_2 = arith.constant 0 : i32
    return %c0_i32, %c0_i32_0, %c0_i32_1 : i32, i32, i32
  }
  func.func @transform_2(%arg0: i32) -> (i32, i32) {
    %c0_i32 = arith.constant 0 : i32
    %c0_i32_0 = arith.constant 0 : i32
    %c0_i32_1 = arith.constant 0 : i32
    return %c0_i32, %c0_i32_0 : i32, i32
  }
  func.func @transform_3(%arg0: i32) -> (i32, i32) {
    %c0_i32 = arith.constant 0 : i32
    %c0_i32_0 = arith.constant 0 : i32
    return %arg0, %c0_i32 : i32, i32
  }
}

</mosaic_0001>

<llo_original>
// kernel: downsample_pallas.1
$region0: #{downsample_pallas.1}
  #allocation0 [shape = 'u32[]', space=smem, size = 0x4, offset = 0x4, fixed_abs, tag = 'smem constant byte address 0x4 - core index']
  #allocation1 [shape = 'u32[144,128]{1,0:T(1,128)}', space=vmem, size = 0x12000, scoped, tag = 'internal scratch']
  %s0 = inlined_call_operand.vmem [shape: f32[16,3,2,9,4], index: 0, kind: input, shape index: {}]
  %s1 = inlined_call_operand.vmem [shape: f32[9,4,128], index: 1, kind: input, shape index: {}]
  %s2 = inlined_call_operand.vmem [shape: f32[1,128], index: 2, kind: input, shape index: {}]
  %s3 = inlined_call_operand.vmem [shape: f32[128,128], index: 3, kind: output, shape index: {}]
  %s4 = sld [smem:[#allocation0]]
  $region45: #{downsample_pallas.1} parent=0
    _
  %s6 = ssub.s32 1, %s4
  %s7 = scalar_select 0, %s6, %s4
  loop: start=0, step=1, limit=4
  $region2: #{downsample_pallas.1} parent=0 // loop_pre_header
    _
  $region3: #{downsample_pallas.1} parent=0 // loop_header
    %s9 = sphi 0, %s13
    %p10 = scmp.ge.s32.totalorder %s9, 4
    %s19 = sphi 0, %s21
    %s22 = sphi 0, %s19
    %s23 = sphi 0, %s22
    %s39 = sphi 0, %s23
    %s43 = sphi 0, %s43
    %s45 = sphi 0, %s43
    %s46 = sphi 0, %s45
    %s60 = sphi 0, %s46
    %s64 = sphi 0, %s64
    %s66 = sphi 0, %s64
    %s67 = sphi 0, %s66
    %s81 = sphi 0, %s67
    %s87 = sphi 0, %s89
    %s90 = sphi 0, %s87
    %s91 = sphi 0, %s90
    %s107 = sphi 0, %s91
  $region4: #{downsample_pallas.1} parent=0 // loop_header_branch
    %12 = sbr.rel (%p10) target = $region8
  $region5: #{downsample_pallas.1} parent=0 // loop_body
    %s14 = ssub.s32 %s9, 1
    %s15 = ssub.s32 %s9, 2
    %s16 = sadd.s32 %s9, 1
    %s17 = ssub.s32 %s9, %s16
    %p18 = scmp.eq.s32.totalorder %s17, 0
    %s20 = sadd.s32 %s19, 1
    %s21 = scalar_select %p18, %s19, %s20
    %p24 = pneg %p18
    %p25 = scmp.eq.s32.totalorder %s9, 1
    %p26 = por %p24, %p25
    %p27 = scmp.ne.s32.totalorder %s19, %s22
    %p28 = scmp.eq.s32.totalorder %s9, 0
    %p29 = por %p27, %p28
    %p30 = scmp.ne.s32.totalorder %s19, %s22
    %p31 = scmp.eq.s32.totalorder %s14, 1
    %p32 = por %p30, %p31
    %p33 = scmp.ne.s32.totalorder %s22, %s23
    %p34 = scmp.eq.s32.totalorder %s14, 0
    %p35 = por %p33, %p34
    %p36 = scmp.ne.s32.totalorder %s22, %s23
    %p37 = scmp.eq.s32.totalorder %s15, 1
    %p38 = por %p36, %p37
    %p40 = scmp.ne.s32.totalorder %s23, %s39
    %p41 = scmp.eq.s32.totalorder %s15, 0
    %p42 = por %p40, %p41
    %s44 = sadd.s32 %s43, 1
    %p47 = scmp.eq.s32.totalorder %s9, 1
    %p48 = scmp.ne.s32.totalorder %s43, %s45
    %p49 = scmp.eq.s32.totalorder %s9, 0
    %p50 = por %p48, %p49
    %p51 = scmp.ne.s32.totalorder %s43, %s45
    %p52 = scmp.eq.s32.totalorder %s14, 1
    %p53 = por %p51, %p52
    %p54 = scmp.ne.s32.totalorder %s45, %s46
    %p55 = scmp.eq.s32.totalorder %s14, 0
    %p56 = por %p54, %p55
    %p57 = scmp.ne.s32.totalorder %s45, %s46
    %p58 = scmp.eq.s32.totalorder %s15, 1
    %p59 = por %p57, %p58
    %p61 = scmp.ne.s32.totalorder %s46, %s60
    %p62 = scmp.eq.s32.totalorder %s15, 0
    %p63 = por %p61, %p62
    %s65 = sadd.s32 %s64, 1
    %p68 = scmp.eq.s32.totalorder %s9, 1
    %p69 = scmp.ne.s32.totalorder %s64, %s66
    %p70 = scmp.eq.s32.totalorder %s9, 0
    %p71 = por %p69, %p70
    %p72 = scmp.ne.s32.totalorder %s64, %s66
    %p73 = scmp.eq.s32.totalorder %s14, 1
    %p74 = por %p72, %p73
    %p75 = scmp.ne.s32.totalorder %s66, %s67
    %p76 = scmp.eq.s32.totalorder %s14, 0
    %p77 = por %p75, %p76
    %p78 = scmp.ne.s32.totalorder %s66, %s67
    %p79 = scmp.eq.s32.totalorder %s15, 1
    %p80 = por %p78, %p79
    %p82 = scmp.ne.s32.totalorder %s67, %s81
    %p83 = scmp.eq.s32.totalorder %s15, 0
    %p84 = por %p82, %p83
    %s85 = ssub.s32 %s9, %s16
    %p86 = scmp.eq.s32.totalorder %s85, 0
    %s88 = sadd.s32 %s87, 1
    %s89 = scalar_select %p86, %s87, %s88
    %p92 = pneg %p86
    %p93 = scmp.eq.s32.totalorder %s9, 1
    %p94 = por %p92, %p93
    %p95 = scmp.ne.s32.totalorder %s87, %s90
    %p96 = scmp.eq.s32.totalorder %s9, 0
    %p97 = por %p95, %p96
    %p98 = scmp.ne.s32.totalorder %s87, %s90
    %p99 = scmp.eq.s32.totalorder %s14, 1
    %p100 = por %p98, %p99
    %p101 = scmp.ne.s32.totalorder %s90, %s91
    %p102 = scmp.eq.s32.totalorder %s14, 0
    %p103 = por %p101, %p102
    %p104 = scmp.ne.s32.totalorder %s90, %s91
    %p105 = scmp.eq.s32.totalorder %s15, 1
    %p106 = por %p104, %p105
    %p108 = scmp.ne.s32.totalorder %s91, %s107
    %p109 = scmp.eq.s32.totalorder %s15, 0
    %p110 = por %p108, %p109
    %p111 = scmp.le.s32.totalorder 1, %s9
    %p112 = scmp.lt.s32.totalorder %s9, 3
    %p113 = pnand %p111, %p112
    %p114 = pneg %p113
    // Predicated region
    $region9: #{downsample_pallas.1} parent=5 // pred_check
      _
    $region10: #{downsample_pallas.1} parent=5 // pred_check_branch
      %116 = sbr.rel (%p113) target = $region12
    $region11: #{downsample_pallas.1} parent=5 // pred_region
      %s117 = ssub.s32 %s9, 1
      // Predicated region
      $region13: #{downsample_pallas.1} parent=11 // pred_check
        %p118 = pneg %p56
      $region14: #{downsample_pallas.1} parent=11 // pred_check_branch
        %120 = sbr.rel (%p118) target = $region16
      $region15: #{downsample_pallas.1} parent=11 // pred_region
        _
      $region16: #{downsample_pallas.1} parent=11 // pred_fallthru
        _
      // Predicated region
      $region17: #{downsample_pallas.1} parent=11 // pred_check
        %p121 = pneg %p77
      $region18: #{downsample_pallas.1} parent=11 // pred_check_branch
        %123 = sbr.rel (%p121) target = $region20
      $region19: #{downsample_pallas.1} parent=11 // pred_region
        _
      $region20: #{downsample_pallas.1} parent=11 // pred_fallthru
        _
    $region12: #{downsample_pallas.1} parent=5 // pred_fallthru
      _
    %p124 = scmp.lt.s32.totalorder %s9, 2
    // Predicated region
    $region21: #{downsample_pallas.1} parent=5 // pred_check
      %p125 = pneg %p124
    $region22: #{downsample_pallas.1} parent=5 // pred_check_branch
      %127 = sbr.rel (%p125) target = $region24
    $region23: #{downsample_pallas.1} parent=5 // pred_region
      // Predicated region
      $region25: #{downsample_pallas.1} parent=23 // pred_check
        %p128 = pneg %p29
      $region26: #{downsample_pallas.1} parent=23 // pred_check_branch
        %130 = sbr.rel (%p128) target = $region28
      $region27: #{downsample_pallas.1} parent=23 // pred_region
        %s131 = smul.u32 8, %s9
        %p132 = scmp.lt.s32.totalorder %s131, 15
        %s133 = scalar_select %p132, %s131, 15
        %s134 = smul.addr %s133, 12
        %s135 = smul.addr %s134, 8
        %s136 = scalar_lea.vmem %s0, %s135
        %s137 = smul.u32 8, %s9
      $region28: #{downsample_pallas.1} parent=23 // pred_fallthru
        _
    $region24: #{downsample_pallas.1} parent=5 // pred_fallthru
      _
    %p138 = scmp.le.s32.totalorder 1, %s9
    %p139 = scmp.lt.s32.totalorder %s9, 3
    %p140 = pnand %p138, %p139
    %p141 = pneg %p140
    // Predicated region
    $region29: #{downsample_pallas.1} parent=5 // pred_check
      _
    $region30: #{downsample_pallas.1} parent=5 // pred_check_branch
      %143 = sbr.rel (%p140) target = $region32
    $region31: #{downsample_pallas.1} parent=5 // pred_region
      %s144 = ssub.s32 %s9, 1
      %s145 = smul.u32 8, %s14
      %p146 = scmp.lt.s32.totalorder %s145, 15
      %s147 = scalar_select %p146, %s145, 15
      %s148 = smul.addr %s147, 12
      %s149 = smul.addr %s148, 8
      %s150 = scalar_lea.vmem %s0, %s149
      %p151 = pneg %p35
      %p152 = pneg %p32
      %p153 = pneg %p56
      %p154 = pneg %p53
      %p155 = pneg %p77
      %p156 = pneg %p74
      %p157 = pneg %p103
      %p158 = pneg %p100
      %s159 = smul.u32 8, %s14
      %p160 = scmp.lt.s32.totalorder %s159, 15
      %s161 = scalar_select %p160, %s159, 15
      %s162 = smul.addr %s161, 8
      %s163 = scalar_lea.vmem %s3, %s162
      %s164 = smul.u32 8, %s14
      %p165 = scmp.lt.s32.totalorder %s164, 15
      %s166 = scalar_select %p165, %s164, 15
      %s167 = smul.addr %s166, 12
      %s168 = smul.addr %s167, 8
      %s169 = scalar_lea.vmem %s0, %s168
      %s170 = smul.u32 8, %s14
      %s171 = smul.u32 8, %s14
      %p172 = scmp.lt.s32.totalorder %s171, 15
      %s173 = scalar_select %p172, %s171, 15
      %s174 = smul.addr %s173, 8
      %s175 = scalar_lea.vmem %s3, %s174
      %s176 = smul.u32 8, %s14
      %v177 = vld [vmem:[%s169] sm:$0xff]
      %v178 = vld [vmem:[%s169 + $0x60] sm:$0xff]
      %v179 = vld [vmem:[%s169 + $0xc0] sm:$0xff]
      %v180 = vld [vmem:[%s169 + $0x120] sm:$0xff]
      %v181 = vld [vmem:[%s169 + $0x180] sm:$0xff]
      %v182 = vld [vmem:[%s169 + $0x1e0] sm:$0xff]
      %v183 = vld [vmem:[%s169 + $0x240] sm:$0xff]
      %v184 = vld [vmem:[%s169 + $0x2a0] sm:$0xff]
      %v185 = vld [vmem:[%s1] sm:$0xf]
      %s186 = scalar_lea.vmem %s169, 16
      %v187 = vld [vmem:[%s186] sm:$0xff]
      %v188 = vld [vmem:[%s186 + $0x60] sm:$0xff]
      %v189 = vld [vmem:[%s186 + $0xc0] sm:$0xff]
      %v190 = vld [vmem:[%s186 + $0x120] sm:$0xff]
      %v191 = vld [vmem:[%s186 + $0x180] sm:$0xff]
      %v192 = vld [vmem:[%s186 + $0x1e0] sm:$0xff]
      %v193 = vld [vmem:[%s186 + $0x240] sm:$0xff]
      %v194 = vld [vmem:[%s186 + $0x2a0] sm:$0xff]
      %s195 = scalar_lea.vmem %s1, 4
      %v196 = vld [vmem:[%s195] sm:$0xf]
      %vm197 = vcmask 31744
      %v199 = vsel %vm197, %v187, 0
      %v202 = vsel %vm197, %v188, 0
      %v205 = vsel %vm197, %v189, 0
      %v208 = vsel %vm197, %v190, 0
      %v211 = vsel %vm197, %v191, 0
      %v214 = vsel %vm197, %v192, 0
      %v217 = vsel %vm197, %v193, 0
      %v220 = vsel %vm197, %v194, 0
      %vm222 = vcmask 1043456
      %v224 = vsel %vm222, %v196, 0
      %226 = vmatprep.subr.mxu0 0.0
      %227 = vmatpush1.msra.mxu0 %v224
      %228 = vmatprep.subr.mxu0 0.0
      %229 = vmatpush1.msra.mxu0 0.0
      %230 = vmatprep.subr.mxu0 0.0
      %231 = vmatpush1.msra.mxu0 0.0
      %232 = vmatprep.subr.mxu0 0.0
      %233 = vmatpush1.msra.mxu0 0.0
      %234 = vmatprep.subr.mxu0 0.0
      %235 = vmatpush1.msra.mxu0 0.0
      %236 = vmatprep.subr.mxu0 0.0
      %237 = vmatpush1.msra.mxu0 0.0
      %238 = vmatprep.subr.mxu0 0.0
      %239 = vmatpush1.msra.mxu0 0.0
      %240 = vmatprep.subr.mxu0 0.0
      %241 = vmatpush1.msra.mxu0 0.0
      %242 = vmatprep.subr.mxu0 0.0
      %243 = vmatpush1.msra.mxu0 0.0
      %244 = vmatprep.subr.mxu0 0.0
      %245 = vmatpush1.msra.mxu0 0.0
      %246 = vmatprep.subr.mxu0 0.0
      %247 = vmatpush1.msra.mxu0 0.0
      %248 = vmatprep.subr.mxu0 0.0
      %249 = vmatpush1.msra.mxu0 0.0
      %250 = vmatprep.subr.mxu0 0.0
      %251 = vmatpush1.msra.mxu0 0.0
      %252 = vmatprep.subr.mxu0 0.0
      %253 = vmatpush1.msra.mxu0 0.0
      %254 = vmatprep.subr.mxu0 0.0
      %255 = vmatpush1.msra.mxu0 0.0
      %256 = vmatprep.subr.mxu0 0.0
      %257 = vmatpush1.msra.mxu0 0.0
      %258 = vmatprep.subr.mxu0 0.0
      %259 = vmatpush1.msra.mxu0 0.0
      %260 = vmatprep.subr.mxu0 0.0
      %261 = vmatpush1.msra.mxu0 0.0
      %262 = vmatprep.subr.mxu0 0.0
      %263 = vmatpush1.msra.mxu0 0.0
      %264 = vmatprep.subr.mxu0 0.0
      %265 = vmatpush1.msra.mxu0 0.0
      %266 = vmatprep.subr.mxu0 0.0
      %267 = vmatpush1.msra.mxu0 0.0
      %268 = vmatprep.subr.mxu0 0.0
      %269 = vmatpush1.msra.mxu0 0.0
      %270 = vmatprep.subr.mxu0 0.0
      %271 = vmatpush1.msra.mxu0 0.0
      %272 = vmatprep.subr.mxu0 0.0
      %273 = vmatpush1.msra.mxu0 0.0
      %274 = vmatprep.subr.mxu0 0.0
      %275 = vmatpush1.msra.mxu0 0.0
      %276 = vmatprep.subr.mxu0 0.0
      %277 = vmatpush1.msra.mxu0 0.0
      %278 = vmatprep.subr.mxu0 0.0
      %279 = vmatpush1.msra.mxu0 0.0
      %280 = vmatprep.subr.mxu0 0.0
      %281 = vmatpush1.msra.mxu0 0.0
      %282 = vmatprep.subr.mxu0 0.0
      %283 = vmatpush1.msra.mxu0 0.0
      %284 = vmatprep.subr.mxu0 0.0
      %285 = vmatpush1.msra.mxu0 0.0
      %286 = vmatprep.subr.mxu0 0.0
      %287 = vmatpush1.msra.mxu0 0.0
      %288 = vmatprep.subr.mxu0 0.0
      %289 = vmatpush1.msra.mxu0 0.0
      %290 = vmatprep.mubr.f32.mxu0 0.0
      %291 = vmatmul.mubr.f32.gmra.mrb[0].mxu0 %v199
      %v292 = vpop.f32.mrb[0].mxu0
      %v293 = vadd.f32 0.0, %v292
      %v294 = vpop.f32.mrb[0].mxu0
      %295 = vmatprep.mubr.f32.mxu0 0.0
      %296 = vmatmul.mubr.f32.gmra.mrb[0].mxu0 %v202
      %v297 = vpop.f32.mrb[0].mxu0
      %v298 = vadd.f32 0.0, %v297
      %v299 = vpop.f32.mrb[0].mxu0
      %300 = vmatprep.mubr.f32.mxu0 0.0
      %301 = vmatmul.mubr.f32.gmra.mrb[0].mxu0 %v205
      %v302 = vpop.f32.mrb[0].mxu0
      %v303 = vadd.f32 0.0, %v302
      %v304 = vpop.f32.mrb[0].mxu0
      %305 = vmatprep.mubr.f32.mxu0 0.0
      %306 = vmatmul.mubr.f32.gmra.mrb[0].mxu0 %v208
      %v307 = vpop.f32.mrb[0].mxu0
      %v308 = vadd.f32 0.0, %v307
      %v309 = vpop.f32.mrb[0].mxu0
      %310 = vmatprep.mubr.f32.mxu0 0.0
      %311 = vmatmul.mubr.f32.gmra.mrb[0].mxu0 %v211
      %v312 = vpop.f32.mrb[0].mxu0
      %v313 = vadd.f32 0.0, %v312
      %v314 = vpop.f32.mrb[0].mxu0
      %315 = vmatprep.mubr.f32.mxu0 0.0
      %316 = vmatmul.mubr.f32.gmra.mrb[0].mxu0 %v214
      %v317 = vpop.f32.mrb[0].mxu0
      %v318 = vadd.f32 0.0, %v317
      %v319 = vpop.f32.mrb[0].mxu0
      %320 = vmatprep.mubr.f32.mxu0 0.0
      %321 = vmatmul.mubr.f32.gmra.mrb[0].mxu0 %v217
      %v322 = vpop.f32.mrb[0].mxu0
      %v323 = vadd.f32 0.0, %v322
      %v324 = vpop.f32.mrb[0].mxu0
      %325 = vmatprep.mubr.f32.mxu0 0.0
      %326 = vmatmul.mubr.f32.gmra.mrb[0].mxu0 %v220
      %v327 = vpop.f32.mrb[0].mxu0
      %v328 = vadd.f32 0.0, %v327
      %v329 = vpop.f32.mrb[0].mxu0
      %330 = vdwg.mxu0
      %v332 = vsel %vm197, %v177, 0
      %v335 = vsel %vm197, %v178, 0
      %v338 = vsel %vm197, %v179, 0
      %v341 = vsel %vm197, %v180, 0
      %v344 = vsel %vm197, %v181, 0
      %v347 = vsel %vm197, %v182, 0
      %v350 = vsel %vm197, %v183, 0
      %v353 = vsel %vm197, %v184, 0
      %v356 = vsel %vm222, %v185, 0
      %358 = vmatprep.subr.mxu0 0.0
      %359 = vmatpush1.msra.mxu0 %v356
      %360 = vmatprep.subr.mxu0 0.0
      %361 = vmatpush1.msra.mxu0 0.0
      %362 = vmatprep.subr.mxu0 0.0
      %363 = vmatpush1.msra.mxu0 0.0
      %364 = vmatprep.subr.mxu0 0.0
      %365 = vmatpush1.msra.mxu0 0.0
      %366 = vmatprep.subr.mxu0 0.0
      %367 = vmatpush1.msra.mxu0 0.0
      %368 = vmatprep.subr.mxu0 0.0
      %369 = vmatpush1.msra.mxu0 0.0
      %370 = vmatprep.subr.mxu0 0.0
      %371 = vmatpush1.msra.mxu0 0.0
      %372 = vmatprep.subr.mxu0 0.0
      %373 = vmatpush1.msra.mxu0 0.0
      %374 = vmatprep.subr.mxu0 0.0
      %375 = vmatpush1.msra.mxu0 0.0
      %376 = vmatprep.subr.mxu0 0.0
      %377 = vmatpush1.msra.mxu0 0.0
      %378 = vmatprep.subr.mxu0 0.0
      %379 = vmatpush1.msra.mxu0 0.0
      %380 = vmatprep.subr.mxu0 0.0
      %381 = vmatpush1.msra.mxu0 0.0
      %382 = vmatprep.subr.mxu0 0.0
      %383 = vmatpush1.msra.mxu0 0.0
      %384 = vmatprep.subr.mxu0 0.0
      %385 = vmatpush1.msra.mxu0 0.0
      %386 = vmatprep.subr.mxu0 0.0
      %387 = vmatpush1.msra.mxu0 0.0
      %388 = vmatprep.subr.mxu0 0.0
      %389 = vmatpush1.msra.mxu0 0.0
      %390 = vmatprep.subr.mxu0 0.0
      %391 = vmatpush1.msra.mxu0 0.0
      %392 = vmatprep.subr.mxu0 0.0
      %393 = vmatpush1.msra.mxu0 0.0
      %394 = vmatprep.subr.mxu0 0.0
      %395 = vmatpush1.msra.mxu0 0.0
      %396 = vmatprep.subr.mxu0 0.0
      %397 = vmatpush1.msra.mxu0 0.0
      %398 = vmatprep.subr.mxu0 0.0
      %399 = vmatpush1.msra.mxu0 0.0
      %400 = vmatprep.subr.mxu0 0.0
      %401 = vmatpush1.msra.mxu0 0.0
      %402 = vmatprep.subr.mxu0 0.0
      %403 = vmatpush1.msra.mxu0 0.0
      %404 = vmatprep.subr.mxu0 0.0
      %405 = vmatpush1.msra.mxu0 0.0
      %406 = vmatprep.subr.mxu0 0.0
      %407 = vmatpush1.msra.mxu0 0.0
      %408 = vmatprep.subr.mxu0 0.0
      %409 = vmatpush1.msra.mxu0 0.0
      %410 = vmatprep.subr.mxu0 0.0
      %411 = vmatpush1.msra.mxu0 0.0
      %412 = vmatprep.subr.mxu0 0.0
      %413 = vmatpush1.msra.mxu0 0.0
      %414 = vmatprep.subr.mxu0 0.0
      %415 = vmatpush1.msra.mxu0 0.0
      %416 = vmatprep.subr.mxu0 0.0
      %417 = vmatpush1.msra.mxu0 0.0
      %418 = vmatprep.subr.mxu0 0.0
      %419 = vmatpush1.msra.mxu0 0.0
      %420 = vmatprep.subr.mxu0 0.0
      %421 = vmatpush1.msra.mxu0 0.0
      %422 = vmatprep.mubr.f32.mxu0 0.0
      %423 = vmatmul.mubr.f32.gmra.mrb[0].mxu0 %v332
      %v424 = vpop.f32.mrb[0].mxu0
      %v425 = vadd.f32 %v293, %v424
      %v426 = vpop.f32.mrb[0].mxu0
      %427 = vmatprep.mubr.f32.mxu0 0.0
      %428 = vmatmul.mubr.f32.gmra.mrb[0].mxu0 %v335
      %v429 = vpop.f32.mrb[0].mxu0
      %v430 = vadd.f32 %v298, %v429
      %v431 = vpop.f32.mrb[0].mxu0
      %432 = vmatprep.mubr.f32.mxu0 0.0
      %433 = vmatmul.mubr.f32.gmra.mrb[0].mxu0 %v338
      %v434 = vpop.f32.mrb[0].mxu0
      %v435 = vadd.f32 %v303, %v434
      %v436 = vpop.f32.mrb[0].mxu0
      %437 = vmatprep.mubr.f32.mxu0 0.0
      %438 = vmatmul.mubr.f32.gmra.mrb[0].mxu0 %v341
      %v439 = vpop.f32.mrb[0].mxu0
      %v440 = vadd.f32 %v308, %v439
      %v441 = vpop.f32.mrb[0].mxu0
      %442 = vmatprep.mubr.f32.mxu0 0.0
      %443 = vmatmul.mubr.f32.gmra.mrb[0].mxu0 %v344
      %v444 = vpop.f32.mrb[0].mxu0
      %v445 = vadd.f32 %v313, %v444
      %v446 = vpop.f32.mrb[0].mxu0
      %447 = vmatprep.mubr.f32.mxu0 0.0
      %448 = vmatmul.mubr.f32.gmra.mrb[0].mxu0 %v347
      %v449 = vpop.f32.mrb[0].mxu0
      %v450 = vadd.f32 %v318, %v449
      %v451 = vpop.f32.mrb[0].mxu0
      %452 = vmatprep.mubr.f32.mxu0 0.0
      %453 = vmatmul.mubr.f32.gmra.mrb[0].mxu0 %v350
      %v454 = vpop.f32.mrb[0].mxu0
      %v455 = vadd.f32 %v323, %v454
      %v456 = vpop.f32.mrb[0].mxu0
      %457 = vmatprep.mubr.f32.mxu0 0.0
      %458 = vmatmul.mubr.f32.gmra.mrb[0].mxu0 %v353
      %v459 = vpop.f32.mrb[0].mxu0
      %v460 = vadd.f32 %v328, %v459
      %v461 = vpop.f32.mrb[0].mxu0
      %462 = vdwg.mxu0
      %v463 = vld [vmem:[%s169 + $0x1] sm:$0xff]
      %v464 = vld [vmem:[%s169 + $0x61] sm:$0xff]
      %v465 = vld [vmem:[%s169 + $0xc1] sm:$0xff]
      %v466 = vld [vmem:[%s169 + $0x121] sm:$0xff]
      %v467 = vld [vmem:[%s169 + $0x181] sm:$0xff]
      %v468 = vld [vmem:[%s169 + $0x1e1] sm:$0xff]
      %v469 = vld [vmem:[%s169 + $0x241] sm:$0xff]
      %v470 = vld [vmem:[%s169 + $0x2a1] sm:$0xff]
      %s471 = scalar_lea.vmem %s1, 8
      %v472 = vld [vmem:[%s471] sm:$0xf]
      %v474 = vsel %vm197, %v463, 0
      %v477 = vsel %vm197, %v464, 0
      %v480 = vsel %vm197, %v465, 0
      %v483 = vsel %vm197, %v466, 0
      %v486 = vsel %vm197, %v467, 0
      %v489 = vsel %vm197, %v468, 0
      %v492 = vsel %vm197, %v469, 0
      %v495 = vsel %vm197, %v470, 0
      %v498 = vsel %vm222, %v472, 0
      %500 = vmatprep.subr.mxu0 0.0
      %501 = vmatpush1.msra.mxu0 %v498
      %502 = vmatprep.subr.mxu0 0.0
      %503 = vmatpush1.msra.mxu0 0.0
      %504 = vmatprep.subr.mxu0 0.0
      %505 = vmatpush1.msra.mxu0 0.0
      %506 = vmatprep.subr.mxu0 0.0
      %507 = vmatpush1.msra.mxu0 0.0
      %508 = vmatprep.subr.mxu0 0.0
      %509 = vmatpush1.msra.mxu0 0.0
      %510 = vmatprep.subr.mxu0 0.0
      %511 = vmatpush1.msra.mxu0 0.0
      %512 = vmatprep.subr.mxu0 0.0
      %513 = vmatpush1.msra.mxu0 0.0
      %514 = vmatprep.subr.mxu0 0.0
      %515 = vmatpush1.msra.mxu0 0.0
      %516 = vmatprep.subr.mxu0 0.0
      %517 = vmatpush1.msra.mxu0 0.0
      %518 = vmatprep.subr.mxu0 0.0
      %519 = vmatpush1.msra.mxu0 0.0
      %520 = vmatprep.subr.mxu0 0.0
      %521 = vmatpush1.msra.mxu0 0.0
      %522 = vmatprep.subr.mxu0 0.0
      %523 = vmatpush1.msra.mxu0 0.0
      %524 = vmatprep.subr.mxu0 0.0
      %525 = vmatpush1.msra.mxu0 0.0
      %526 = vmatprep.subr.mxu0 0.0
      %527 = vmatpush1.msra.mxu0 0.0
      %528 = vmatprep.subr.mxu0 0.0
      %529 = vmatpush1.msra.mxu0 0.0
      %530 = vmatprep.subr.mxu0 0.0
      %531 = vmatpush1.msra.mxu0 0.0
      %532 = vmatprep.subr.mxu0 0.0
      %533 = vmatpush1.msra.mxu0 0.0
      %534 = vmatprep.subr.mxu0 0.0
      %535 = vmatpush1.msra.mxu0 0.0
      %536 = vmatprep.subr.mxu0 0.0
      %537 = vmatpush1.msra.mxu0 0.0
      %538 = vmatprep.subr.mxu0 0.0
      %539 = vmatpush1.msra.mxu0 0.0
      %540 = vmatprep.subr.mxu0 0.0
      %541 = vmatpush1.msra.mxu0 0.0
      %542 = vmatprep.subr.mxu0 0.0
      %543 = vmatpush1.msra.mxu0 0.0
      %544 = vmatprep.subr.mxu0 0.0
      %545 = vmatpush1.msra.mxu0 0.0
      %546 = vmatprep.subr.mxu0 0.0
      %547 = vmatpush1.msra.mxu0 0.0
      %548 = vmatprep.subr.mxu0 0.0
      %549 = vmatpush1.msra.mxu0 0.0
      %550 = vmatprep.subr.mxu0 0.0
      %551 = vmatpush1.msra.mxu0 0.0
      %552 = vmatprep.subr.mxu0 0.0
      %553 = vmatpush1.msra.mxu0 0.0
      %554 = vmatprep.subr.mxu0 0.0
      %555 = vmatpush1.msra.mxu0 0.0
      %556 = vmatprep.subr.mxu0 0.0
      %557 = vmatpush1.msra.mxu0 0.0
      %558 = vmatprep.subr.mxu0 0.0
      %559 = vmatpush1.msra.mxu0 0.0
      %560 = vmatprep.subr.mxu0 0.0
      %561 = vmatpush1.msra.mxu0 0.0
      %562 = vmatprep.subr.mxu0 0.0
      %563 = vmatpush1.msra.mxu0 0.0
      %564 = vmatprep.mubr.f32.mxu0 0.0
      %565 = vmatmul.mubr.f32.gmra.mrb[0].mxu0 %v474
      %v566 = vpop.f32.mrb[0].mxu0
      %v567 = vadd.f32 0.0, %v566
      %v568 = vpop.f32.mrb[0].mxu0
      %569 = vmatprep.mubr.f32.mxu0 0.0
      %570 = vmatmul.mubr.f32.gmra.mrb[0].mxu0 %v477
      %v571 = vpop.f32.mrb[0].mxu0
      %v572 = vadd.f32 0.0, %v571
      %v573 = vpop.f32.mrb[0].mxu0
      %574 = vmatprep.mubr.f32.mxu0 0.0
      %575 = vmatmul.mubr.f32.gmra.mrb[0].mxu0 %v480
      %v576 = vpop.f32.mrb[0].mxu0
      %v577 = vadd.f32 0.0, %v576
      %v578 = vpop.f32.mrb[0].mxu0
      %579 = vmatprep.mubr.f32.mxu0 0.0
      %580 = vmatmul.mubr.f32.gmra.mrb[0].mxu0 %v483
      %v581 = vpop.f32.mrb[0].mxu0
      %v582 = vadd.f32 0.0, %v581
      %v583 = vpop.f32.mrb[0].mxu0
      %584 = vmatprep.mubr.f32.mxu0 0.0
      %585 = vmatmul.mubr.f32.gmra.mrb[0].mxu0 %v486
      %v586 = vpop.f32.mrb[0].mxu0
      %v587 = vadd.f32 0.0, %v586
      %v588 = vpop.f32.mrb[0].mxu0
      %589 = vmatprep.mubr.f32.mxu0 0.0
      %590 = vmatmul.mubr.f32.gmra.mrb[0].mxu0 %v489
      %v591 = vpop.f32.mrb[0].mxu0
      %v592 = vadd.f32 0.0, %v591
      %v593 = vpop.f32.mrb[0].mxu0
      %594 = vmatprep.mubr.f32.mxu0 0.0
      %595 = vmatmul.mubr.f32.gmra.mrb[0].mxu0 %v492
      %v596 = vpop.f32.mrb[0].mxu0
      %v597 = vadd.f32 0.0, %v596
      %v598 = vpop.f32.mrb[0].mxu0
      %599 = vmatprep.mubr.f32.mxu0 0.0
      %600 = vmatmul.mubr.f32.gmra.mrb[0].mxu0 %v495
      %v601 = vpop.f32.mrb[0].mxu0
      %v602 = vadd.f32 0.0, %v601
      %v603 = vpop.f32.mrb[0].mxu0
      %604 = vdwg.mxu0
      %v605 = vadd.f32 %v425, %v567
      %v606 = vadd.f32 %v430, %v572
      %v607 = vadd.f32 %v435, %v577
      %v608 = vadd.f32 %v440, %v582
      %v609 = vadd.f32 %v445, %v587
      %v610 = vadd.f32 %v450, %v592
      %v611 = vadd.f32 %v455, %v597
      %v612 = vadd.f32 %v460, %v602
      %s613 = scalar_lea.vmem %s169, 32
      %v614 = vld [vmem:[%s613] sm:$0xff]
      %v615 = vld [vmem:[%s613 + $0x60] sm:$0xff]
      %v616 = vld [vmem:[%s613 + $0xc0] sm:$0xff]
      %v617 = vld [vmem:[%s613 + $0x120] sm:$0xff]
      %v618 = vld [vmem:[%s613 + $0x180] sm:$0xff]
      %v619 = vld [vmem:[%s613 + $0x1e0] sm:$0xff]
      %v620 = vld [vmem:[%s613 + $0x240] sm:$0xff]
      %v621 = vld [vmem:[%s613 + $0x2a0] sm:$0xff]
      %s622 = scalar_lea.vmem %s1, 12
      %v623 = vld [vmem:[%s622] sm:$0xf]
      %v625 = vsel %vm197, %v614, 0
      %v628 = vsel %vm197, %v615, 0
      %v631 = vsel %vm197, %v616, 0
      %v634 = vsel %vm197, %v617, 0
      %v637 = vsel %vm197, %v618, 0
      %v640 = vsel %vm197, %v619, 0
      %v643 = vsel %vm197, %v620, 0
      %v646 = vsel %vm197, %v621, 0
      %v649 = vsel %vm222, %v623, 0
      %651 = vmatprep.subr.mxu0 0.0
      %652 = vmatpush1.msra.mxu0 %v649
      %653 = vmatprep.subr.mxu0 0.0
      %654 = vmatpush1.msra.mxu0 0.0
      %655 = vmatprep.subr.mxu0 0.0
      %656 = vmatpush1.msra.mxu0 0.0
      %657 = vmatprep.subr.mxu0 0.0
      %658 = vmatpush1.msra.mxu0 0.0
      %659 = vmatprep.subr.mxu0 0.0
      %660 = vmatpush1.msra.mxu0 0.0
      %661 = vmatprep.subr.mxu0 0.0
      %662 = vmatpush1.msra.mxu0 0.0
      %663 = vmatprep.subr.mxu0 0.0
      %664 = vmatpush1.msra.mxu0 0.0
      %665 = vmatprep.subr.mxu0 0.0
      %666 = vmatpush1.msra.mxu0 0.0
      %667 = vmatprep.subr.mxu0 0.0
      %668 = vmatpush1.msra.mxu0 0.0
      %669 = vmatprep.subr.mxu0 0.0
      %670 = vmatpush1.msra.mxu0 0.0
      %671 = vmatprep.subr.mxu0 0.0
      %672 = vmatpush1.msra.mxu0 0.0
      %673 = vmatprep.subr.mxu0 0.0
      %674 = vmatpush1.msra.mxu0 0.0
      %675 = vmatprep.subr.mxu0 0.0
      %676 = vmatpush1.msra.mxu0 0.0
      %677 = vmatprep.subr.mxu0 0.0
      %678 = vmatpush1.msra.mxu0 0.0
      %679 = vmatprep.subr.mxu0 0.0
      %680 = vmatpush1.msra.mxu0 0.0
      %681 = vmatprep.subr.mxu0 0.0
      %682 = vmatpush1.msra.mxu0 0.0
      %683 = vmatprep.subr.mxu0 0.0
      %684 = vmatpush1.msra.mxu0 0.0
      %685 = vmatprep.subr.mxu0 0.0
      %686 = vmatpush1.msra.mxu0 0.0
      %687 = vmatprep.subr.mxu0 0.0
      %688 = vmatpush1.msra.mxu0 0.0
      %689 = vmatprep.subr.mxu0 0.0
      %690 = vmatpush1.msra.mxu0 0.0
      %691 = vmatprep.subr.mxu0 0.0
      %692 = vmatpush1.msra.mxu0 0.0
      %693 = vmatprep.subr.mxu0 0.0
      %694 = vmatpush1.msra.mxu0 0.0
      %695 = vmatprep.subr.mxu0 0.0
      %696 = vmatpush1.msra.mxu0 0.0
      %697 = vmatprep.subr.mxu0 0.0
      %698 = vmatpush1.msra.mxu0 0.0
      %699 = vmatprep.subr.mxu0 0.0
      %700 = vmatpush1.msra.mxu0 0.0
      %701 = vmatprep.subr.mxu0 0.0
      %702 = vmatpush1.msra.mxu0 0.0
      %703 = vmatprep.subr.mxu0 0.0
      %704 = vmatpush1.msra.mxu0 0.0
      %705 = vmatprep.subr.mxu0 0.0
      %706 = vmatpush1.msra.mxu0 0.0
      %707 = vmatprep.subr.mxu0 0.0
      %708 = vmatpush1.msra.mxu0 0.0
      %709 = vmatprep.subr.mxu0 0.0
      %710 = vmatpush1.msra.mxu0 0.0
      %711 = vmatprep.subr.mxu0 0.0
      %712 = vmatpush1.msra.mxu0 0.0
      %713 = vmatprep.subr.mxu0 0.0
      %714 = vmatpush1.msra.mxu0 0.0
      %715 = vmatprep.mubr.f32.mxu0 0.0
      %716 = vmatmul.mubr.f32.gmra.mrb[0].mxu0 %v625
      %v717 = vpop.f32.mrb[0].mxu0
      %v718 = vadd.f32 0.0, %v717
      %v719 = vpop.f32.mrb[0].mxu0
      %720 = vmatprep.mubr.f32.mxu0 0.0
      %721 = vmatmul.mubr.f32.gmra.mrb[0].mxu0 %v628
      %v722 = vpop.f32.mrb[0].mxu0
      %v723 = vadd.f32 0.0, %v722
      %v724 = vpop.f32.mrb[0].mxu0
      %725 = vmatprep.mubr.f32.mxu0 0.0
      %726 = vmatmul.mubr.f32.gmra.mrb[0].mxu0 %v631
      %v727 = vpop.f32.mrb[0].mxu0
      %v728 = vadd.f32 0.0, %v727
      %v729 = vpop.f32.mrb[0].mxu0
      %730 = vmatprep.mubr.f32.mxu0 0.0
      %731 = vmatmul.mubr.f32.gmra.mrb[0].mxu0 %v634
      %v732 = vpop.f32.mrb[0].mxu0
      %v733 = vadd.f32 0.0, %v732
      %v734 = vpop.f32.mrb[0].mxu0
      %735 = vmatprep.mubr.f32.mxu0 0.0
      %736 = vmatmul.mubr.f32.gmra.mrb[0].mxu0 %v637
      %v737 = vpop.f32.mrb[0].mxu0
      %v738 = vadd.f32 0.0, %v737
      %v739 = vpop.f32.mrb[0].mxu0
      %740 = vmatprep.mubr.f32.mxu0 0.0
      %741 = vmatmul.mubr.f32.gmra.mrb[0].mxu0 %v640
      %v742 = vpop.f32.mrb[0].mxu0
      %v743 = vadd.f32 0.0, %v742
      %v744 = vpop.f32.mrb[0].mxu0
      %745 = vmatprep.mubr.f32.mxu0 0.0
      %746 = vmatmul.mubr.f32.gmra.mrb[0].mxu0 %v643
      %v747 = vpop.f32.mrb[0].mxu0
      %v748 = vadd.f32 0.0, %v747
      %v749 = vpop.f32.mrb[0].mxu0
      %750 = vmatprep.mubr.f32.mxu0 0.0
      %751 = vmatmul.mubr.f32.gmra.mrb[0].mxu0 %v646
      %v752 = vpop.f32.mrb[0].mxu0
      %v753 = vadd.f32 0.0, %v752
      %v754 = vpop.f32.mrb[0].mxu0
      %755 = vdwg.mxu0
      %v756 = vadd.f32 %v605, %v718
      %v757 = vadd.f32 %v606, %v723
      %v758 = vadd.f32 %v607, %v728
      %v759 = vadd.f32 %v608, %v733
      %v760 = vadd.f32 %v609, %v738
      %v761 = vadd.f32 %v610, %v743
      %v762 = vadd.f32 %v611, %v748
      %v763 = vadd.f32 %v612, %v753
      %s764 = scalar_lea.vmem %s169, 48
      %v765 = vld [vmem:[%s764] sm:$0xff]
      %v766 = vld [vmem:[%s764 + $0x60] sm:$0xff]
      %v767 = vld [vmem:[%s764 + $0xc0] sm:$0xff]
      %v768 = vld [vmem:[%s764 + $0x120] sm:$0xff]
      %v769 = vld [vmem:[%s764 + $0x180] sm:$0xff]
      %v770 = vld [vmem:[%s764 + $0x1e0] sm:$0xff]
      %v771 = vld [vmem:[%s764 + $0x240] sm:$0xff]
      %v772 = vld [vmem:[%s764 + $0x2a0] sm:$0xff]
      %s773 = scalar_lea.vmem %s1, 16
      %v774 = vld [vmem:[%s773] sm:$0xf]
      %v776 = vsel %vm197, %v765, 0
      %v779 = vsel %vm197, %v766, 0
      %v782 = vsel %vm197, %v767, 0
      %v785 = vsel %vm197, %v768, 0
      %v788 = vsel %vm197, %v769, 0
      %v791 = vsel %vm197, %v770, 0
      %v794 = vsel %vm197, %v771, 0
      %v797 = vsel %vm197, %v772, 0
      %v800 = vsel %vm222, %v774, 0
      %802 = vmatprep.subr.mxu0 0.0
      %803 = vmatpush1.msra.mxu0 %v800
      %804 = vmatprep.subr.mxu0 0.0
      %805 = vmatpush1.msra.mxu0 0.0
      %806 = vmatprep.subr.mxu0 0.0
      %807 = vmatpush1.msra.mxu0 0.0
      %808 = vmatprep.subr.mxu0 0.0
      %809 = vmatpush1.msra.mxu0 0.0
      %810 = vmatprep.subr.mxu0 0.0
      %811 = vmatpush1.msra.mxu0 0.0
      %812 = vmatprep.subr.mxu0 0.0
      %813 = vmatpush1.msra.mxu0 0.0
      %814 = vmatprep.subr.mxu0 0.0
      %815 = vmatpush1.msra.mxu0 0.0
      %816 = vmatprep.subr.mxu0 0.0
      %817 = vmatpush1.msra.mxu0 0.0
      %818 = vmatprep.subr.mxu0 0.0
      %819 = vmatpush1.msra.mxu0 0.0
      %820 = vmatprep.subr.mxu0 0.0
      %821 = vmatpush1.msra.mxu0 0.0
      %822 = vmatprep.subr.mxu0 0.0
      %823 = vmatpush1.msra.mxu0 0.0
      %824 = vmatprep.subr.mxu0 0.0
      %825 = vmatpush1.msra.mxu0 0.0
      %826 = vmatprep.subr.mxu0 0.0
      %827 = vmatpush1.msra.mxu0 0.0
      %828 = vmatprep.subr.mxu0 0.0
      %829 = vmatpush1.msra.mxu0 0.0
      %830 = vmatprep.subr.mxu0 0.0
      %831 = vmatpush1.msra.mxu0 0.0
      %832 = vmatprep.subr.mxu0 0.0
      %833 = vmatpush1.msra.mxu0 0.0
      %834 = vmatprep.subr.mxu0 0.0
      %835 = vmatpush1.msra.mxu0 0.0
      %836 = vmatprep.subr.mxu0 0.0
      %837 = vmatpush1.msra.mxu0 0.0
      %838 = vmatprep.subr.mxu0 0.0
      %839 = vmatpush1.msra.mxu0 0.0
      %840 = vmatprep.subr.mxu0 0.0
      %841 = vmatpush1.msra.mxu0 0.0
      %842 = vmatprep.subr.mxu0 0.0
      %843 = vmatpush1.msra.mxu0 0.0
      %844 = vmatprep.subr.mxu0 0.0
      %845 = vmatpush1.msra.mxu0 0.0
      %846 = vmatprep.subr.mxu0 0.0
      %847 = vmatpush1.msra.mxu0 0.0
      %848 = vmatprep.subr.mxu0 0.0
      %849 = vmatpush1.msra.mxu0 0.0
      %850 = vmatprep.subr.mxu0 0.0
      %851 = vmatpush1.msra.mxu0 0.0
      %852 = vmatprep.subr.mxu0 0.0
      %853 = vmatpush1.msra.mxu0 0.0
      %854 = vmatprep.subr.mxu0 0.0
      %855 = vmatpush1.msra.mxu0 0.0
      %856 = vmatprep.subr.mxu0 0.0
      %857 = vmatpush1.msra.mxu0 0.0
      %858 = vmatprep.subr.mxu0 0.0
      %859 = vmatpush1.msra.mxu0 0.0
      %860 = vmatprep.subr.mxu0 0.0
      %861 = vmatpush1.msra.mxu0 0.0
      %862 = vmatprep.subr.mxu0 0.0
      %863 = vmatpush1.msra.mxu0 0.0
      %864 = vmatprep.subr.mxu0 0.0
      %865 = vmatpush1.msra.mxu0 0.0
      %866 = vmatprep.mubr.f32.mxu0 0.0
      %867 = vmatmul.mubr.f32.gmra.mrb[0].mxu0 %v776
      %v868 = vpop.f32.mrb[0].mxu0
      %v869 = vadd.f32 0.0, %v868
      %v870 = vpop.f32.mrb[0].mxu0
      %871 = vmatprep.mubr.f32.mxu0 0.0
      %872 = vmatmul.mubr.f32.gmra.mrb[0].mxu0 %v779
      %v873 = vpop.f32.mrb[0].mxu0
      %v874 = vadd.f32 0.0, %v873
      %v875 = vpop.f32.mrb[0].mxu0
      %876 = vmatprep.mubr.f32.mxu0 0.0
      %877 = vmatmul.mubr.f32.gmra.mrb[0].mxu0 %v782
      %v878 = vpop.f32.mrb[0].mxu0
      %v879 = vadd.f32 0.0, %v878
      %v880 = vpop.f32.mrb[0].mxu0
      %881 = vmatprep.mubr.f32.mxu0 0.0
      %882 = vmatmul.mubr.f32.gmra.mrb[0].mxu0 %v785
      %v883 = vpop.f32.mrb[0].mxu0
      %v884 = vadd.f32 0.0, %v883
      %v885 = vpop.f32.mrb[0].mxu0
      %886 = vmatprep.mubr.f32.mxu0 0.0
      %887 = vmatmul.mubr.f32.gmra.mrb[0].mxu0 %v788
      %v888 = vpop.f32.mrb[0].mxu0
      %v889 = vadd.f32 0.0, %v888
      %v890 = vpop.f32.mrb[0].mxu0
      %891 = vmatprep.mubr.f32.mxu0 0.0
      %892 = vmatmul.mubr.f32.gmra.mrb[0].mxu0 %v791
      %v893 = vpop.f32.mrb[0].mxu0
      %v894 = vadd.f32 0.0, %v893
      %v895 = vpop.f32.mrb[0].mxu0
      %896 = vmatprep.mubr.f32.mxu0 0.0
      %897 = vmatmul.mubr.f32.gmra.mrb[0].mxu0 %v794
      %v898 = vpop.f32.mrb[0].mxu0
      %v899 = vadd.f32 0.0, %v898
      %v900 = vpop.f32.mrb[0].mxu0
      %901 = vmatprep.mubr.f32.mxu0 0.0
      %902 = vmatmul.mubr.f32.gmra.mrb[0].mxu0 %v797
      %v903 = vpop.f32.mrb[0].mxu0
      %v904 = vadd.f32 0.0, %v903
      %v905 = vpop.f32.mrb[0].mxu0
      %906 = vdwg.mxu0
      %v907 = vadd.f32 %v756, %v869
      %v908 = vadd.f32 %v757, %v874
      %v909 = vadd.f32 %v758, %v879
      %v910 = vadd.f32 %v759, %v884
      %v911 = vadd.f32 %v760, %v889
      %v912 = vadd.f32 %v761, %v894
      %v913 = vadd.f32 %v762, %v899
      %v914 = vadd.f32 %v763, %v904
      %v915 = vld [vmem:[%s613 + $0x1] sm:$0xff]
      %v916 = vld [vmem:[%s613 + $0x61] sm:$0xff]
      %v917 = vld [vmem:[%s613 + $0xc1] sm:$0xff]
      %v918 = vld [vmem:[%s613 + $0x121] sm:$0xff]
      %v919 = vld [vmem:[%s613 + $0x181] sm:$0xff]
      %v920 = vld [vmem:[%s613 + $0x1e1] sm:$0xff]
      %v921 = vld [vmem:[%s613 + $0x241] sm:$0xff]
      %v922 = vld [vmem:[%s613 + $0x2a1] sm:$0xff]
      %s923 = scalar_lea.vmem %s1, 20
      %v924 = vld [vmem:[%s923] sm:$0xf]
      %v926 = vsel %vm197, %v915, 0
      %v929 = vsel %vm197, %v916, 0
      %v932 = vsel %vm197, %v917, 0
      %v935 = vsel %vm197, %v918, 0
      %v938 = vsel %vm197, %v919, 0
      %v941 = vsel %vm197, %v920, 0
      %v944 = vsel %vm197, %v921, 0
      %v947 = vsel %vm197, %v922, 0
      %v950 = vsel %vm222, %v924, 0
      %952 = vmatprep.subr.mxu0 0.0
      %953 = vmatpush1.msra.mxu0 %v950
      %954 = vmatprep.subr.mxu0 0.0
      %955 = vmatpush1.msra.mxu0 0.0
      %956 = vmatprep.subr.mxu0 0.0
      %957 = vmatpush1.msra.mxu0 0.0
      %958 = vmatprep.subr.mxu0 0.0
      %959 = vmatpush1.msra.mxu0 0.0
      %960 = vmatprep.subr.mxu0 0.0
      %961 = vmatpush1.msra.mxu0 0.0
      %962 = vmatprep.subr.mxu0 0.0
      %963 = vmatpush1.msra.mxu0 0.0
      %964 = vmatprep.subr.mxu0 0.0
      %965 = vmatpush1.msra.mxu0 0.0
      %966 = vmatprep.subr.mxu0 0.0
      %967 = vmatpush1.msra.mxu0 0.0
      %968 = vmatprep.subr.mxu0 0.0
      %969 = vmatpush1.msra.mxu0 0.0
      %970 = vmatprep.subr.mxu0 0.0
      %971 = vmatpush1.msra.mxu0 0.0
      %972 = vmatprep.subr.mxu0 0.0
      %973 = vmatpush1.msra.mxu0 0.0
      %974 = vmatprep.subr.mxu0 0.0
      %975 = vmatpush1.msra.mxu0 0.0
      %976 = vmatprep.subr.mxu0 0.0
      %977 = vmatpush1.msra.mxu0 0.0
      %978 = vmatprep.subr.mxu0 0.0
      %979 = vmatpush1.msra.mxu0 0.0
      %980 = vmatprep.subr.mxu0 0.0
      %981 = vmatpush1.msra.mxu0 0.0
      %982 = vmatprep.subr.mxu0 0.0
      %983 = vmatpush1.msra.mxu0 0.0
      %984 = vmatprep.subr.mxu0 0.0
      %985 = vmatpush1.msra.mxu0 0.0
      %986 = vmatprep.subr.mxu0 0.0
      %987 = vmatpush1.msra.mxu0 0.0
      %988 = vmatprep.subr.mxu0 0.0
      %989 = vmatpush1.msra.mxu0 0.0
      %990 = vmatprep.subr.mxu0 0.0
      %991 = vmatpush1.msra.mxu0 0.0
      %992 = vmatprep.subr.mxu0 0.0
      %993 = vmatpush1.msra.mxu0 0.0
      %994 = vmatprep.subr.mxu0 0.0
      %995 = vmatpush1.msra.mxu0 0.0
      %996 = vmatprep.subr.mxu0 0.0
      %997 = vmatpush1.msra.mxu0 0.0
      %998 = vmatprep.subr.mxu0 0.0
      %999 = vmatpush1.msra.mxu0 0.0
      %1000 = vmatprep.subr.mxu0 0.0
      %1001 = vmatpush1.msra.mxu0 0.0
      %1002 = vmatprep.subr.mxu0 0.0
      %1003 = vmatpush1.msra.mxu0 0.0
      %1004 = vmatprep.subr.mxu0 0.0
      %1005 = vmatpush1.msra.mxu0 0.0
      %1006 = vmatprep.subr.mxu0 0.0
      %1007 = vmatpush1.msra.mxu0 0.0
      %1008 = vmatprep.subr.mxu0 0.0
      %1009 = vmatpush1.msra.mxu0 0.0
      %1010 = vmatprep.subr.mxu0 0.0
      %1011 = vmatpush1.msra.mxu0 0.0
      %1012 = vmatprep.subr.mxu0 0.0
      %1013 = vmatpush1.msra.mxu0 0.0
      %1014 = vmatprep.subr.mxu0 0.0
      %1015 = vmatpush1.msra.mxu0 0.0
      %1016 = vmatprep.mubr.f32.mxu0 0.0
      %1017 = vmatmul.mubr.f32.gmra.mrb[0].mxu0 %v926
      %v1018 = vpop.f32.mrb[0].mxu0
      %v1019 = vadd.f32 0.0, %v1018
      %v1020 = vpop.f32.mrb[0].mxu0
      %1021 = vmatprep.mubr.f32.mxu0 0.0
      %1022 = vmatmul.mubr.f32.gmra.mrb[0].mxu0 %v929
      %v1023 = vpop.f32.mrb[0].mxu0
      %v1024 = vadd.f32 0.0, %v1023
      %v1025 = vpop.f32.mrb[0].mxu0
      %1026 = vmatprep.mubr.f32.mxu0 0.0
      %1027 = vmatmul.mubr.f32.gmra.mrb[0].mxu0 %v932
      %v1028 = vpop.f32.mrb[0].mxu0
      %v1029 = vadd.f32 0.0, %v1028
      %v1030 = vpop.f32.mrb[0].mxu0
      %1031 = vmatprep.mubr.f32.mxu0 0.0
      %1032 = vmatmul.mubr.f32.gmra.mrb[0].mxu0 %v935
      %v1033 = vpop.f32.mrb[0].mxu0
      %v1034 = vadd.f32 0.0, %v1033
      %v1035 = vpop.f32.mrb[0].mxu0
      %1036 = vmatprep.mubr.f32.mxu0 0.0
      %1037 = vmatmul.mubr.f32.gmra.mrb[0].mxu0 %v938
      %v1038 = vpop.f32.mrb[0].mxu0
      %v1039 = vadd.f32 0.0, %v1038
      %v1040 = vpop.f32.mrb[0].mxu0
      %1041 = vmatprep.mubr.f32.mxu0 0.0
      %1042 = vmatmul.mubr.f32.gmra.mrb[0].mxu0 %v941
      %v1043 = vpop.f32.mrb[0].mxu0
      %v1044 = vadd.f32 0.0, %v1043
      %v1045 = vpop.f32.mrb[0].mxu0
      %1046 = vmatprep.mubr.f32.mxu0 0.0
      %1047 = vmatmul.mubr.f32.gmra.mrb[0].mxu0 %v944
      %v1048 = vpop.f32.mrb[0].mxu0
      %v1049 = vadd.f32 0.0, %v1048
      %v1050 = vpop.f32.mrb[0].mxu0
      %1051 = vmatprep.mubr.f32.mxu0 0.0
      %1052 = vmatmul.mubr.f32.gmra.mrb[0].mxu0 %v947
      %v1053 = vpop.f32.mrb[0].mxu0
      %v1054 = vadd.f32 0.0, %v1053
      %v1055 = vpop.f32.mrb[0].mxu0
      %1056 = vdwg.mxu0
      %v1057 = vadd.f32 %v907, %v1019
      %v1058 = vadd.f32 %v908, %v1024
      %v1059 = vadd.f32 %v909, %v1029
      %v1060 = vadd.f32 %v910, %v1034
      %v1061 = vadd.f32 %v911, %v1039
      %v1062 = vadd.f32 %v912, %v1044
      %v1063 = vadd.f32 %v913, %v1049
      %v1064 = vadd.f32 %v914, %v1054
      %s1065 = scalar_lea.vmem %s169, 64
      %v1066 = vld [vmem:[%s1065] sm:$0xff]
      %v1067 = vld [vmem:[%s1065 + $0x60] sm:$0xff]
      %v1068 = vld [vmem:[%s1065 + $0xc0] sm:$0xff]
      %v1069 = vld [vmem:[%s1065 + $0x120] sm:$0xff]
      %v1070 = vld [vmem:[%s1065 + $0x180] sm:$0xff]
      %v1071 = vld [vmem:[%s1065 + $0x1e0] sm:$0xff]
      %v1072 = vld [vmem:[%s1065 + $0x240] sm:$0xff]
      %v1073 = vld [vmem:[%s1065 + $0x2a0] sm:$0xff]
      %s1074 = scalar_lea.vmem %s1, 24
      %v1075 = vld [vmem:[%s1074] sm:$0xf]
      %v1077 = vsel %vm197, %v1066, 0
      %v1080 = vsel %vm197, %v1067, 0
      %v1083 = vsel %vm197, %v1068, 0
      %v1086 = vsel %vm197, %v1069, 0
      %v1089 = vsel %vm197, %v1070, 0
      %v1092 = vsel %vm197, %v1071, 0
      %v1095 = vsel %vm197, %v1072, 0
      %v1098 = vsel %vm197, %v1073, 0
      %v1101 = vsel %vm222, %v1075, 0
      %1103 = vmatprep.subr.mxu0 0.0
      %1104 = vmatpush1.msra.mxu0 %v1101
      %1105 = vmatprep.subr.mxu0 0.0
      %1106 = vmatpush1.msra.mxu0 0.0
      %1107 = vmatprep.subr.mxu0 0.0
      %1108 = vmatpush1.msra.mxu0 0.0
      %1109 = vmatprep.subr.mxu0 0.0
      %1110 = vmatpush1.msra.mxu0 0.0
      %1111 = vmatprep.subr.mxu0 0.0
      %1112 = vmatpush1.msra.mxu0 0.0
      %1113 = vmatprep.subr.mxu0 0.0
      %1114 = vmatpush1.msra.mxu0 0.0
      %1115 = vmatprep.subr.mxu0 0.0
      %1116 = vmatpush1.msra.mxu0 0.0
      %1117 = vmatprep.subr.mxu0 0.0
      %1118 = vmatpush1.msra.mxu0 0.0
      %1119 = vmatprep.subr.mxu0 0.0
      %1120 = vmatpush1.msra.mxu0 0.0
      %1121 = vmatprep.subr.mxu0 0.0
      %1122 = vmatpush1.msra.mxu0 0.0
      %1123 = vmatprep.subr.mxu0 0.0
      %1124 = vmatpush1.msra.mxu0 0.0
      %1125 = vmatprep.subr.mxu0 0.0
      %1126 = vmatpush1.msra.mxu0 0.0
      %1127 = vmatprep.subr.mxu0 0.0
      %1128 = vmatpush1.msra.mxu0 0.0
      %1129 = vmatprep.subr.mxu0 0.0
      %1130 = vmatpush1.msra.mxu0 0.0
      %1131 = vmatprep.subr.mxu0 0.0
      %1132 = vmatpush1.msra.mxu0 0.0
      %1133 = vmatprep.subr.mxu0 0.0
      %1134 = vmatpush1.msra.mxu0 0.0
      %1135 = vmatprep.subr.mxu0 0.0
      %1136 = vmatpush1.msra.mxu0 0.0
      %1137 = vmatprep.subr.mxu0 0.0
      %1138 = vmatpush1.msra.mxu0 0.0
      %1139 = vmatprep.subr.mxu0 0.0
      %1140 = vmatpush1.msra.mxu0 0.0
      %1141 = vmatprep.subr.mxu0 0.0
      %1142 = vmatpush1.msra.mxu0 0.0
      %1143 = vmatprep.subr.mxu0 0.0
      %1144 = vmatpush1.msra.mxu0 0.0
      %1145 = vmatprep.subr.mxu0 0.0
      %1146 = vmatpush1.msra.mxu0 0.0
      %1147 = vmatprep.subr.mxu0 0.0
      %1148 = vmatpush1.msra.mxu0 0.0
      %1149 = vmatprep.subr.mxu0 0.0
      %1150 = vmatpush1.msra.mxu0 0.0
      %1151 = vmatprep.subr.mxu0 0.0
      %1152 = vmatpush1.msra.mxu0 0.0
      %1153 = vmatprep.subr.mxu0 0.0
      %1154 = vmatpush1.msra.mxu0 0.0
      %1155 = vmatprep.subr.mxu0 0.0
      %1156 = vmatpush1.msra.mxu0 0.0
      %1157 = vmatprep.subr.mxu0 0.0
      %1158 = vmatpush1.msra.mxu0 0.0
      %1159 = vmatprep.subr.mxu0 0.0
      %1160 = vmatpush1.msra.mxu0 0.0
      %1161 = vmatprep.subr.mxu0 0.0
      %1162 = vmatpush1.msra.mxu0 0.0
      %1163 = vmatprep.subr.mxu0 0.0
      %1164 = vmatpush1.msra.mxu0 0.0
      %1165 = vmatprep.subr.mxu0 0.0
      %1166 = vmatpush1.msra.mxu0 0.0
      %1167 = vmatprep.mubr.f32.mxu0 0.0
      %1168 = vmatmul.mubr.f32.gmra.mrb[0].mxu0 %v1077
      %v1169 = vpop.f32.mrb[0].mxu0
      %v1170 = vadd.f32 0.0, %v1169
      %v1171 = vpop.f32.mrb[0].mxu0
      %1172 = vmatprep.mubr.f32.mxu0 0.0
      %1173 = vmatmul.mubr.f32.gmra.mrb[0].mxu0 %v1080
      %v1174 = vpop.f32.mrb[0].mxu0
      %v1175 = vadd.f32 0.0, %v1174
      %v1176 = vpop.f32.mrb[0].mxu0
      %1177 = vmatprep.mubr.f32.mxu0 0.0
      %1178 = vmatmul.mubr.f32.gmra.mrb[0].mxu0 %v1083
      %v1179 = vpop.f32.mrb[0].mxu0
      %v1180 = vadd.f32 0.0, %v1179
      %v1181 = vpop.f32.mrb[0].mxu0
      %1182 = vmatprep.mubr.f32.mxu0 0.0
      %1183 = vmatmul.mubr.f32.gmra.mrb[0].mxu0 %v1086
      %v1184 = vpop.f32.mrb[0].mxu0
      %v1185 = vadd.f32 0.0, %v1184
      %v1186 = vpop.f32.mrb[0].mxu0
      %1187 = vmatprep.mubr.f32.mxu0 0.0
      %1188 = vmatmul.mubr.f32.gmra.mrb[0].mxu0 %v1089
      %v1189 = vpop.f32.mrb[0].mxu0
      %v1190 = vadd.f32 0.0, %v1189
      %v1191 = vpop.f32.mrb[0].mxu0
      %1192 = vmatprep.mubr.f32.mxu0 0.0
      %1193 = vmatmul.mubr.f32.gmra.mrb[0].mxu0 %v1092
      %v1194 = vpop.f32.mrb[0].mxu0
      %v1195 = vadd.f32 0.0, %v1194
      %v1196 = vpop.f32.mrb[0].mxu0
      %1197 = vmatprep.mubr.f32.mxu0 0.0
      %1198 = vmatmul.mubr.f32.gmra.mrb[0].mxu0 %v1095
      %v1199 = vpop.f32.mrb[0].mxu0
      %v1200 = vadd.f32 0.0, %v1199
      %v1201 = vpop.f32.mrb[0].mxu0
      %1202 = vmatprep.mubr.f32.mxu0 0.0
      %1203 = vmatmul.mubr.f32.gmra.mrb[0].mxu0 %v1098
      %v1204 = vpop.f32.mrb[0].mxu0
      %v1205 = vadd.f32 0.0, %v1204
      %v1206 = vpop.f32.mrb[0].mxu0
      %1207 = vdwg.mxu0
      %v1208 = vadd.f32 %v1057, %v1170
      %v1209 = vadd.f32 %v1058, %v1175
      %v1210 = vadd.f32 %v1059, %v1180
      %v1211 = vadd.f32 %v1060, %v1185
      %v1212 = vadd.f32 %v1061, %v1190
      %v1213 = vadd.f32 %v1062, %v1195
      %v1214 = vadd.f32 %v1063, %v1200
      %v1215 = vadd.f32 %v1064, %v1205
      %s1216 = scalar_lea.vmem %s169, 80
      %v1217 = vld [vmem:[%s1216] sm:$0xff]
      %v1218 = vld [vmem:[%s1216 + $0x60] sm:$0xff]
      %v1219 = vld [vmem:[%s1216 + $0xc0] sm:$0xff]
      %v1220 = vld [vmem:[%s1216 + $0x120] sm:$0xff]
      %v1221 = vld [vmem:[%s1216 + $0x180] sm:$0xff]
      %v1222 = vld [vmem:[%s1216 + $0x1e0] sm:$0xff]
      %v1223 = vld [vmem:[%s1216 + $0x240] sm:$0xff]
      %v1224 = vld [vmem:[%s1216 + $0x2a0] sm:$0xff]
      %s1225 = scalar_lea.vmem %s1, 28
      %v1226 = vld [vmem:[%s1225] sm:$0xf]
      %v1228 = vsel %vm197, %v1217, 0
      %v1231 = vsel %vm197, %v1218, 0
      %v1234 = vsel %vm197, %v1219, 0
      %v1237 = vsel %vm197, %v1220, 0
      %v1240 = vsel %vm197, %v1221, 0
      %v1243 = vsel %vm197, %v1222, 0
      %v1246 = vsel %vm197, %v1223, 0
      %v1249 = vsel %vm197, %v1224, 0
      %v1252 = vsel %vm222, %v1226, 0
      %1254 = vmatprep.subr.mxu0 0.0
      %1255 = vmatpush1.msra.mxu0 %v1252
      %1256 = vmatprep.subr.mxu0 0.0
      %1257 = vmatpush1.msra.mxu0 0.0
      %1258 = vmatprep.subr.mxu0 0.0
      %1259 = vmatpush1.msra.mxu0 0.0
      %1260 = vmatprep.subr.mxu0 0.0
      %1261 = vmatpush1.msra.mxu0 0.0
      %1262 = vmatprep.subr.mxu0 0.0
      %1263 = vmatpush1.msra.mxu0 0.0
      %1264 = vmatprep.subr.mxu0 0.0
      %1265 = vmatpush1.msra.mxu0 0.0
      %1266 = vmatprep.subr.mxu0 0.0
      %1267 = vmatpush1.msra.mxu0 0.0
      %1268 = vmatprep.subr.mxu0 0.0
      %1269 = vmatpush1.msra.mxu0 0.0
      %1270 = vmatprep.subr.mxu0 0.0
      %1271 = vmatpush1.msra.mxu0 0.0
      %1272 = vmatprep.subr.mxu0 0.0
      %1273 = vmatpush1.msra.mxu0 0.0
      %1274 = vmatprep.subr.mxu0 0.0
      %1275 = vmatpush1.msra.mxu0 0.0
      %1276 = vmatprep.subr.mxu0 0.0
      %1277 = vmatpush1.msra.mxu0 0.0
      %1278 = vmatprep.subr.mxu0 0.0
      %1279 = vmatpush1.msra.mxu0 0.0
      %1280 = vmatprep.subr.mxu0 0.0
      %1281 = vmatpush1.msra.mxu0 0.0
      %1282 = vmatprep.subr.mxu0 0.0
      %1283 = vmatpush1.msra.mxu0 0.0
      %1284 = vmatprep.subr.mxu0 0.0
      %1285 = vmatpush1.msra.mxu0 0.0
      %1286 = vmatprep.subr.mxu0 0.0
      %1287 = vmatpush1.msra.mxu0 0.0
      %1288 = vmatprep.subr.mxu0 0.0
      %1289 = vmatpush1.msra.mxu0 0.0
      %1290 = vmatprep.subr.mxu0 0.0
      %1291 = vmatpush1.msra.mxu0 0.0
      %1292 = vmatprep.subr.mxu0 0.0
      %1293 = vmatpush1.msra.mxu0 0.0
      %1294 = vmatprep.subr.mxu0 0.0
      %1295 = vmatpush1.msra.mxu0 0.0
      %1296 = vmatprep.subr.mxu0 0.0
      %1297 = vmatpush1.msra.mxu0 0.0
      %1298 = vmatprep.subr.mxu0 0.0
      %1299 = vmatpush1.msra.mxu0 0.0
      %1300 = vmatprep.subr.mxu0 0.0
      %1301 = vmatpush1.msra.mxu0 0.0
      %1302 = vmatprep.subr.mxu0 0.0
      %1303 = vmatpush1.msra.mxu0 0.0
      %1304 = vmatprep.subr.mxu0 0.0
      %1305 = vmatpush1.msra.mxu0 0.0
      %1306 = vmatprep.subr.mxu0 0.0
      %1307 = vmatpush1.msra.mxu0 0.0
      %1308 = vmatprep.subr.mxu0 0.0
      %1309 = vmatpush1.msra.mxu0 0.0
      %1310 = vmatprep.subr.mxu0 0.0
      %1311 = vmatpush1.msra.mxu0 0.0
      %1312 = vmatprep.subr.mxu0 0.0
      %1313 = vmatpush1.msra.mxu0 0.0
      %1314 = vmatprep.subr.mxu0 0.0
      %1315 = vmatpush1.msra.mxu0 0.0
      %1316 = vmatprep.subr.mxu0 0.0
      %1317 = vmatpush1.msra.mxu0 0.0
      %1318 = vmatprep.mubr.f32.mxu0 0.0
      %1319 = vmatmul.mubr.f32.gmra.mrb[0].mxu0 %v1228
      %v1320 = vpop.f32.mrb[0].mxu0
      %v1321 = vadd.f32 0.0, %v1320
      %v1322 = vpop.f32.mrb[0].mxu0
      %1323 = vmatprep.mubr.f32.mxu0 0.0
      %1324 = vmatmul.mubr.f32.gmra.mrb[0].mxu0 %v1231
      %v1325 = vpop.f32.mrb[0].mxu0
      %v1326 = vadd.f32 0.0, %v1325
      %v1327 = vpop.f32.mrb[0].mxu0
      %1328 = vmatprep.mubr.f32.mxu0 0.0
      %1329 = vmatmul.mubr.f32.gmra.mrb[0].mxu0 %v1234
      %v1330 = vpop.f32.mrb[0].mxu0
      %v1331 = vadd.f32 0.0, %v1330
      %v1332 = vpop.f32.mrb[0].mxu0
      %1333 = vmatprep.mubr.f32.mxu0 0.0
      %1334 = vmatmul.mubr.f32.gmra.mrb[0].mxu0 %v1237
      %v1335 = vpop.f32.mrb[0].mxu0
      %v1336 = vadd.f32 0.0, %v1335
      %v1337 = vpop.f32.mrb[0].mxu0
      %1338 = vmatprep.mubr.f32.mxu0 0.0
      %1339 = vmatmul.mubr.f32.gmra.mrb[0].mxu0 %v1240
      %v1340 = vpop.f32.mrb[0].mxu0
      %v1341 = vadd.f32 0.0, %v1340
      %v1342 = vpop.f32.mrb[0].mxu0
      %1343 = vmatprep.mubr.f32.mxu0 0.0
      %1344 = vmatmul.mubr.f32.gmra.mrb[0].mxu0 %v1243
      %v1345 = vpop.f32.mrb[0].mxu0
      %v1346 = vadd.f32 0.0, %v1345
      %v1347 = vpop.f32.mrb[0].mxu0
      %1348 = vmatprep.mubr.f32.mxu0 0.0
      %1349 = vmatmul.mubr.f32.gmra.mrb[0].mxu0 %v1246
      %v1350 = vpop.f32.mrb[0].mxu0
      %v1351 = vadd.f32 0.0, %v1350
      %v1352 = vpop.f32.mrb[0].mxu0
      %1353 = vmatprep.mubr.f32.mxu0 0.0
      %1354 = vmatmul.mubr.f32.gmra.mrb[0].mxu0 %v1249
      %v1355 = vpop.f32.mrb[0].mxu0
      %v1356 = vadd.f32 0.0, %v1355
      %v1357 = vpop.f32.mrb[0].mxu0
      %1358 = vdwg.mxu0
      %v1359 = vadd.f32 %v1208, %v1321
      %v1360 = vadd.f32 %v1209, %v1326
      %v1361 = vadd.f32 %v1210, %v1331
      %v1362 = vadd.f32 %v1211, %v1336
      %v1363 = vadd.f32 %v1212, %v1341
      %v1364 = vadd.f32 %v1213, %v1346
      %v1365 = vadd.f32 %v1214, %v1351
      %v1366 = vadd.f32 %v1215, %v1356
      %v1367 = vld [vmem:[%s1065 + $0x1] sm:$0xff]
      %v1368 = vld [vmem:[%s1065 + $0x61] sm:$0xff]
      %v1369 = vld [vmem:[%s1065 + $0xc1] sm:$0xff]
      %v1370 = vld [vmem:[%s1065 + $0x121] sm:$0xff]
      %v1371 = vld [vmem:[%s1065 + $0x181] sm:$0xff]
      %v1372 = vld [vmem:[%s1065 + $0x1e1] sm:$0xff]
      %v1373 = vld [vmem:[%s1065 + $0x241] sm:$0xff]
      %v1374 = vld [vmem:[%s1065 + $0x2a1] sm:$0xff]
      %s1375 = scalar_lea.vmem %s1, 32
      %v1376 = vld [vmem:[%s1375] sm:$0xf]
      %v1378 = vsel %vm197, %v1367, 0
      %v1381 = vsel %vm197, %v1368, 0
      %v1384 = vsel %vm197, %v1369, 0
      %v1387 = vsel %vm197, %v1370, 0
      %v1390 = vsel %vm197, %v1371, 0
      %v1393 = vsel %vm197, %v1372, 0
      %v1396 = vsel %vm197, %v1373, 0
      %v1399 = vsel %vm197, %v1374, 0
      %v1402 = vsel %vm222, %v1376, 0
      %1404 = vmatprep.subr.mxu0 0.0
      %1405 = vmatpush1.msra.mxu0 %v1402
      %1406 = vmatprep.subr.mxu0 0.0
      %1407 = vmatpush1.msra.mxu0 0.0
      %1408 = vmatprep.subr.mxu0 0.0
      %1409 = vmatpush1.msra.mxu0 0.0
      %1410 = vmatprep.subr.mxu0 0.0
      %1411 = vmatpush1.msra.mxu0 0.0
      %1412 = vmatprep.subr.mxu0 0.0
      %1413 = vmatpush1.msra.mxu0 0.0
      %1414 = vmatprep.subr.mxu0 0.0
      %1415 = vmatpush1.msra.mxu0 0.0
      %1416 = vmatprep.subr.mxu0 0.0
      %1417 = vmatpush1.msra.mxu0 0.0
      %1418 = vmatprep.subr.mxu0 0.0
      %1419 = vmatpush1.msra.mxu0 0.0
      %1420 = vmatprep.subr.mxu0 0.0
      %1421 = vmatpush1.msra.mxu0 0.0
      %1422 = vmatprep.subr.mxu0 0.0
      %1423 = vmatpush1.msra.mxu0 0.0
      %1424 = vmatprep.subr.mxu0 0.0
      %1425 = vmatpush1.msra.mxu0 0.0
      %1426 = vmatprep.subr.mxu0 0.0
      %1427 = vmatpush1.msra.mxu0 0.0
      %1428 = vmatprep.subr.mxu0 0.0
      %1429 = vmatpush1.msra.mxu0 0.0
      %1430 = vmatprep.subr.mxu0 0.0
      %1431 = vmatpush1.msra.mxu0 0.0
      %1432 = vmatprep.subr.mxu0 0.0
      %1433 = vmatpush1.msra.mxu0 0.0
      %1434 = vmatprep.subr.mxu0 0.0
      %1435 = vmatpush1.msra.mxu0 0.0
      %1436 = vmatprep.subr.mxu0 0.0
      %1437 = vmatpush1.msra.mxu0 0.0
      %1438 = vmatprep.subr.mxu0 0.0
      %1439 = vmatpush1.msra.mxu0 0.0
      %1440 = vmatprep.subr.mxu0 0.0
      %1441 = vmatpush1.msra.mxu0 0.0
      %1442 = vmatprep.subr.mxu0 0.0
      %1443 = vmatpush1.msra.mxu0 0.0
      %1444 = vmatprep.subr.mxu0 0.0
      %1445 = vmatpush1.msra.mxu0 0.0
      %1446 = vmatprep.subr.mxu0 0.0
      %1447 = vmatpush1.msra.mxu0 0.0
      %1448 = vmatprep.subr.mxu0 0.0
      %1449 = vmatpush1.msra.mxu0 0.0
      %1450 = vmatprep.subr.mxu0 0.0
      %1451 = vmatpush1.msra.mxu0 0.0
      %1452 = vmatprep.subr.mxu0 0.0
      %1453 = vmatpush1.msra.mxu0 0.0
      %1454 = vmatprep.subr.mxu0 0.0
      %1455 = vmatpush1.msra.mxu0 0.0
      %1456 = vmatprep.subr.mxu0 0.0
      %1457 = vmatpush1.msra.mxu0 0.0
      %1458 = vmatprep.subr.mxu0 0.0
      %1459 = vmatpush1.msra.mxu0 0.0
      %1460 = vmatprep.subr.mxu0 0.0
      %1461 = vmatpush1.msra.mxu0 0.0
      %1462 = vmatprep.subr.mxu0 0.0
      %1463 = vmatpush1.msra.mxu0 0.0
      %1464 = vmatprep.subr.mxu0 0.0
      %1465 = vmatpush1.msra.mxu0 0.0
      %1466 = vmatprep.subr.mxu0 0.0
      %1467 = vmatpush1.msra.mxu0 0.0
      %1468 = vmatprep.mubr.f32.mxu0 0.0
      %1469 = vmatmul.mubr.f32.gmra.mrb[0].mxu0 %v1378
      %v1470 = vpop.f32.mrb[0].mxu0
      %v1471 = vadd.f32 0.0, %v1470
      %v1472 = vpop.f32.mrb[0].mxu0
      %1473 = vmatprep.mubr.f32.mxu0 0.0
      %1474 = vmatmul.mubr.f32.gmra.mrb[0].mxu0 %v1381
      %v1475 = vpop.f32.mrb[0].mxu0
      %v1476 = vadd.f32 0.0, %v1475
      %v1477 = vpop.f32.mrb[0].mxu0
      %1478 = vmatprep.mubr.f32.mxu0 0.0
      %1479 = vmatmul.mubr.f32.gmra.mrb[0].mxu0 %v1384
      %v1480 = vpop.f32.mrb[0].mxu0
      %v1481 = vadd.f32 0.0, %v1480
      %v1482 = vpop.f32.mrb[0].mxu0
      %1483 = vmatprep.mubr.f32.mxu0 0.0
      %1484 = vmatmul.mubr.f32.gmra.mrb[0].mxu0 %v1387
      %v1485 = vpop.f32.mrb[0].mxu0
      %v1486 = vadd.f32 0.0, %v1485
      %v1487 = vpop.f32.mrb[0].mxu0
      %1488 = vmatprep.mubr.f32.mxu0 0.0
      %1489 = vmatmul.mubr.f32.gmra.mrb[0].mxu0 %v1390
      %v1490 = vpop.f32.mrb[0].mxu0
      %v1491 = vadd.f32 0.0, %v1490
      %v1492 = vpop.f32.mrb[0].mxu0
      %1493 = vmatprep.mubr.f32.mxu0 0.0
      %1494 = vmatmul.mubr.f32.gmra.mrb[0].mxu0 %v1393
      %v1495 = vpop.f32.mrb[0].mxu0
      %v1496 = vadd.f32 0.0, %v1495
      %v1497 = vpop.f32.mrb[0].mxu0
      %1498 = vmatprep.mubr.f32.mxu0 0.0
      %1499 = vmatmul.mubr.f32.gmra.mrb[0].mxu0 %v1396
      %v1500 = vpop.f32.mrb[0].mxu0
      %v1501 = vadd.f32 0.0, %v1500
      %v1502 = vpop.f32.mrb[0].mxu0
      %1503 = vmatprep.mubr.f32.mxu0 0.0
      %1504 = vmatmul.mubr.f32.gmra.mrb[0].mxu0 %v1399
      %v1505 = vpop.f32.mrb[0].mxu0
      %v1506 = vadd.f32 0.0, %v1505
      %v1507 = vpop.f32.mrb[0].mxu0
      %1508 = vdwg.mxu0
      %v1509 = vadd.f32 %v1359, %v1471
      %v1510 = vadd.f32 %v1360, %v1476
      %v1511 = vadd.f32 %v1361, %v1481
      %v1512 = vadd.f32 %v1362, %v1486
      %v1513 = vadd.f32 %v1363, %v1491
      %v1514 = vadd.f32 %v1364, %v1496
      %v1515 = vadd.f32 %v1365, %v1501
      %v1516 = vadd.f32 %v1366, %v1506
      %v1517 = vld [vmem:[%s2] sm:$0x1]
      %v1519 = vlaneseq
      %v1520 = vshrl.u32 %v1519, 7
      %v1521 = vsub.s32 0, %v1520
      %v1522 = vrot.slane %v1517, %v1521
      %v1524 = vadd.f32 %v1509, %v1522
      %v1525 = vadd.f32 %v1510, %v1522
      %v1526 = vadd.f32 %v1511, %v1522
      %v1527 = vadd.f32 %v1512, %v1522
      %v1528 = vadd.f32 %v1513, %v1522
      %v1529 = vadd.f32 %v1514, %v1522
      %v1530 = vadd.f32 %v1515, %v1522
      %v1531 = vadd.f32 %v1516, %v1522
      %1532 = vst [vmem:[%s175] sm:$0xff] %v1524
      %1533 = vst [vmem:[%s175 + $0x8] sm:$0xff] %v1525
      %1534 = vst [vmem:[%s175 + $0x10] sm:$0xff] %v1526
      %1535 = vst [vmem:[%s175 + $0x18] sm:$0xff] %v1527
      %1536 = vst [vmem:[%s175 + $0x20] sm:$0xff] %v1528
      %1537 = vst [vmem:[%s175 + $0x28] sm:$0xff] %v1529
      %1538 = vst [vmem:[%s175 + $0x30] sm:$0xff] %v1530
      %1539 = vst [vmem:[%s175 + $0x38] sm:$0xff] %v1531
      %s1540 = smul.u32 8, %s14
      %p1541 = scmp.lt.s32.totalorder %s1540, 15
      %s1542 = scalar_select %p1541, %s1540, 15
      %s1543 = smul.addr %s1542, 8
      %s1544 = scalar_lea.vmem %s3, %s1543
      // Predicated region
      $region33: #{downsample_pallas.1} parent=31 // pred_check
        %p1545 = pneg %p100
      $region34: #{downsample_pallas.1} parent=31 // pred_check_branch
        %1547 = sbr.rel (%p1545) target = $region36
      $region35: #{downsample_pallas.1} parent=31 // pred_region
        %s1548 = smul.u32 8, %s14
      $region36: #{downsample_pallas.1} parent=31 // pred_fallthru
        _
    $region32: #{downsample_pallas.1} parent=5 // pred_fallthru
      _
    %p1549 = scmp.le.s32.totalorder 2, %s9
    // Predicated region
    $region37: #{downsample_pallas.1} parent=5 // pred_check
      %p1550 = pneg %p1549
    $region38: #{downsample_pallas.1} parent=5 // pred_check_branch
      %1552 = sbr.rel (%p1550) target = $region40
    $region39: #{downsample_pallas.1} parent=5 // pred_region
      %s1553 = ssub.s32 %s9, 2
      // Predicated region
      $region41: #{downsample_pallas.1} parent=39 // pred_check
        %p1554 = pneg %p106
      $region42: #{downsample_pallas.1} parent=39 // pred_check_branch
        %1556 = sbr.rel (%p1554) target = $region44
      $region43: #{downsample_pallas.1} parent=39 // pred_region
        %s1557 = smul.u32 8, %s15
        %p1558 = scmp.lt.s32.totalorder %s1557, 15
        %s1559 = scalar_select %p1558, %s1557, 15
        %s1560 = smul.addr %s1559, 8
        %s1561 = scalar_lea.vmem %s3, %s1560
      $region44: #{downsample_pallas.1} parent=39 // pred_fallthru
        _
    $region40: #{downsample_pallas.1} parent=5 // pred_fallthru
      _
  $region6: #{downsample_pallas.1} parent=0 // loop_footer
    %s13 = sadd.s32 1, %s9
  $region7: #{downsample_pallas.1} parent=0 // loop_footer_branch
    %8 = sbr.rel target = $region3
  $region8: #{downsample_pallas.1} parent=0 // loop_exit
    _

</llo_original>
